<compile_context>
chip_gen: v6e
topology: v6e:2x2x1
jax: 0.10.0
libtpu: 0.0.40
codegen_flags: <defaults>
</compile_context>

<pallas_src>
import jax
import jax.numpy as jnp
from jax.experimental import pallas as pl
from jax.experimental.pallas import tpu as pltpu

SEQ = 25            # tokens per sample
H1 = 16
H2 = 32
FLAT = SEQ * H2     # 800
NCLS = 10
NCLS_PAD = 128      # lane-dense output width
NEG_BIG = -1e30     # padded-class bias (kills them in the softmax)


def fused_mlp_logsoftmax_kernel(x_ref, w1_ref, b1_ref, w2_ref, b2_ref,
                                w4_ref, b4_ref, o_ref):
    # x_ref: (TB, SEQ) f32 — cast to bf16 only for the MXU input.
    xb = x_ref[...].astype(jnp.bfloat16)

    # f1 (Linear(1,16)+ReLU) as one matmul against the block-diagonal (25,400)
    # bf16 weight; accumulate + bias + ReLU in f32.
    h1 = jnp.dot(xb, w1_ref[...], preferred_element_type=jnp.float32) + b1_ref[...]
    h1 = jnp.maximum(h1, 0.0)                                         # (TB, 400) f32

    # f2 (Linear(16,32)+ReLU) as one matmul against the block-diagonal (400,800).
    h2 = jnp.dot(h1.astype(jnp.bfloat16), w2_ref[...],
                 preferred_element_type=jnp.float32) + b2_ref[...]
    h2 = jnp.maximum(h2, 0.0)                                         # (TB, 800) f32

    # f4: single (TB,800)@(800,128) matmul; columns >= NCLS have zero weights
    # and a -1e30 bias so they vanish in the softmax.
    logits = jnp.dot(h2.astype(jnp.bfloat16), w4_ref[...],
                     preferred_element_type=jnp.float32) + b4_ref[...]  # (TB, 128)

    # Numerically stable log_softmax over the (padded) class lanes, in f32.
    m = jnp.max(logits, axis=1, keepdims=True)
    z = logits - m
    lse = jnp.log(jnp.sum(jnp.exp(z), axis=1, keepdims=True))
    o_ref[...] = (z - lse).astype(o_ref.dtype)                        # (TB, 128)


def pack_params(w1, b1, w2, b2, w4, b4):
    """One-time repack of PyTorch nn.Linear parameters into kernel layouts.

    Call this ONCE at parameter-setup time and reuse the result for every
    forward; the repack never runs in the per-call hot path.
    Matmul weights are stored in bf16 (MXU-native); biases stay f32.
    """
    eye_s = jnp.eye(SEQ, dtype=jnp.float32)
    # f1: W1bd[s, s*16+k] = w1[k];  h1_flat[b, s*16+k] = x[b,s]*w1[k] + b1[k]
    w1bd = jnp.kron(eye_s, w1.reshape(1, H1).astype(jnp.float32)).astype(jnp.bfloat16)
    b1t = jnp.tile(b1.astype(jnp.float32), SEQ).reshape(1, SEQ * H1)       # (1, 400)
    # f2: block-diagonal W2^T; matches PyTorch h.view(B,-1) flatten order.
    w2bd = jnp.kron(eye_s, w2.T.astype(jnp.float32)).astype(jnp.bfloat16)  # (400, 800)
    b2t = jnp.tile(b2.astype(jnp.float32), SEQ).reshape(1, SEQ * H2)       # (1, 800)
    # f4: (800, 10) padded lane-dense to (800, 128); padded classes get -1e30 bias.
    w4p = (jnp.zeros((FLAT, NCLS_PAD), jnp.float32)
           .at[:, :NCLS].set(w4.T.astype(jnp.float32))
           .astype(jnp.bfloat16))
    b4p = (jnp.full((1, NCLS_PAD), NEG_BIG, jnp.float32)
           .at[0, :NCLS].set(b4.astype(jnp.float32)))
    return (w1bd, b1t, w2bd, b2t, w4p, b4p)


def _round_up(v, m):
    return ((v + m - 1) // m) * m


def _pick_tb(B, max_tb=512):
    # v5e/v6e have a single TensorCore, so the grid is a serial loop: take the
    # whole batch in one tile whenever it fits (VMEM footprint stays a few MB,
    # far under every generation's limit, including v7x's 64 MiB/TC).
    if B <= max_tb:
        return _round_up(max(B, 8), 8)
    # Larger batches: even number of grid steps so v7x's two TensorCores get
    # balanced work under the "parallel" grid axis.
    n_steps = pl.cdiv(B, max_tb)
    if n_steps % 2:
        n_steps += 1
    return _round_up(pl.cdiv(B, n_steps), 8)


def model_forward(x, packed_params, tb=None):
    """x: (B, SEQ, 1) or (B, SEQ) -> (B, NCLS) log-probabilities.

    packed_params: result of pack_params() (already repacked / bf16)."""
    B = x.shape[0]
    w1bd, b1t, w2bd, b2t, w4p, b4p = packed_params

    x2d = x.reshape(B, SEQ).astype(jnp.float32)

    if tb is None:
        tb = _pick_tb(B)
    n_steps = pl.cdiv(B, tb)
    Bp = n_steps * tb
    if Bp != B:
        x2d = jnp.pad(x2d, ((0, Bp - B), (0, 0)))

    out = pl.pallas_call(
        fused_mlp_logsoftmax_kernel,
        out_shape=jax.ShapeDtypeStruct((Bp, NCLS_PAD), jnp.float32),
        grid_spec=pltpu.PrefetchScalarGridSpec(
            num_scalar_prefetch=0,
            grid=(n_steps,),
            in_specs=[
                pl.BlockSpec((tb, SEQ), lambda i: (i, 0)),             # x
                pl.BlockSpec((SEQ, SEQ * H1), lambda i: (0, 0)),       # W1 block-diag (bf16)
                pl.BlockSpec((1, SEQ * H1), lambda i: (0, 0)),         # b1 tiled (f32)
                pl.BlockSpec((SEQ * H1, SEQ * H2), lambda i: (0, 0)),  # W2 block-diag (bf16)
                pl.BlockSpec((1, SEQ * H2), lambda i: (0, 0)),         # b2 tiled (f32)
                pl.BlockSpec((FLAT, NCLS_PAD), lambda i: (0, 0)),      # W4 padded (bf16)
                pl.BlockSpec((1, NCLS_PAD), lambda i: (0, 0)),         # b4 padded (f32)
            ],
            out_specs=pl.BlockSpec((tb, NCLS_PAD), lambda i: (i, 0)),
        ),
        compiler_params=pltpu.CompilerParams(
            dimension_semantics=("parallel",)),
    )(x2d, w1bd, b1t, w2bd, b2t, w4p, b4p)

    return out[:B, :NCLS]


if __name__ == "__main__":
    key = jax.random.PRNGKey(0)
    ks = jax.random.split(key, 7)

    # Deterministic synthetic parameters (PyTorch nn.Linear layouts).
    w1 = jax.random.normal(ks[0], (H1, 1), jnp.float32) * 0.5
    b1 = jax.random.normal(ks[1], (H1,), jnp.float32) * 0.1
    w2 = jax.random.normal(ks[2], (H2, H1), jnp.float32) * 0.2
    b2 = jax.random.normal(ks[3], (H2,), jnp.float32) * 0.1
    w4 = jax.random.normal(ks[4], (NCLS, FLAT), jnp.float32) * 0.05
    b4 = jax.random.normal(ks[5], (NCLS,), jnp.float32) * 0.1

    # One-time repack (runs outside the per-call hot path).
    packed = pack_params(w1, b1, w2, b2, w4, b4)

    B = 64
    x = jax.random.normal(ks[6], (B, SEQ, 1), jnp.float32)

    fwd = jax.jit(model_forward)
    out = fwd(x, packed)
    jax.block_until_ready(out)

    # Pure-JAX f32 reference of the PyTorch forward pass.
    h = jnp.maximum(x @ w1.T + b1, 0.0)            # (B, 25, 16)
    h = jnp.maximum(h @ w2.T + b2, 0.0)            # (B, 25, 32)
    h = h.reshape(B, -1)                           # (B, 800)
    logits = h @ w4.T + b4                         # (B, 10)
    ref = jax.nn.log_softmax(logits, axis=1)

    assert out.shape == (B, NCLS)
    err = float(jnp.max(jnp.abs(out - ref)))
    # bf16 matmul weights/activations vs. f32 reference -> relaxed tolerance.
    assert err < 2e-2, err
    print("KERNEL_OK")
</pallas_src>

<mosaic_0001>
module attributes {stable_mosaic.version = 11 : i64} {
  func.func @fused_mlp_logsoftmax_kernel(%arg0: i32, %arg1: memref<64x25xf32, #tpu.memory_space<vmem>>, %arg2: memref<25x400xbf16, #tpu.memory_space<vmem>>, %arg3: memref<1x400xf32, #tpu.memory_space<vmem>>, %arg4: memref<400x800xbf16, #tpu.memory_space<vmem>>, %arg5: memref<1x800xf32, #tpu.memory_space<vmem>>, %arg6: memref<800x128xbf16, #tpu.memory_space<vmem>>, %arg7: memref<1x128xf32, #tpu.memory_space<vmem>>, %arg8: memref<64x128xf32, #tpu.memory_space<vmem>>) attributes {dimension_semantics = [#tpu.dimension_semantics<parallel>], iteration_bounds = array<i64: 1>, scalar_prefetch = 0 : i64, scratch_operands = 0 : i64, tpu.core_type = #tpu.core_type<tc>, window_params = [{transform_indices = @transform_0, window_bounds = array<i64: 64, 25>}, {pipeline_mode = #tpu.pipeline_mode<synchronous>, transform_indices = @transform_1, window_bounds = array<i64: 25, 400>}, {pipeline_mode = #tpu.pipeline_mode<synchronous>, transform_indices = @transform_2, window_bounds = array<i64: 1, 400>}, {pipeline_mode = #tpu.pipeline_mode<synchronous>, transform_indices = @transform_3, window_bounds = array<i64: 400, 800>}, {pipeline_mode = #tpu.pipeline_mode<synchronous>, transform_indices = @transform_4, window_bounds = array<i64: 1, 800>}, {pipeline_mode = #tpu.pipeline_mode<synchronous>, transform_indices = @transform_5, window_bounds = array<i64: 800, 128>}, {pipeline_mode = #tpu.pipeline_mode<synchronous>, transform_indices = @transform_6, window_bounds = array<i64: 1, 128>}, {transform_indices = @transform_7, window_bounds = array<i64: 64, 128>}]} {
    %c0 = arith.constant 0 : index
    %c0_0 = arith.constant 0 : index
    %0 = vector.load %arg1[%c0, %c0_0] : memref<64x25xf32, #tpu.memory_space<vmem>>, vector<64x25xf32>
    %1 = arith.truncf %0 : vector<64x25xf32> to vector<64x25xbf16>
    %c0_1 = arith.constant 0 : index
    %c0_2 = arith.constant 0 : index
    %2 = vector.load %arg2[%c0_1, %c0_2] : memref<25x400xbf16, #tpu.memory_space<vmem>>, vector<25x400xbf16>
    %cst = arith.constant dense<0.000000e+00> : vector<64x400xf32>
    %3 = tpu.matmul %1, %2, %cst {dimension_numbers = #tpu.dot_dimension_numbers<[1], [0], [0], [1], [0, 0, 1, 1], [], []>} : vector<64x25xbf16>, vector<25x400xbf16>, vector<64x400xf32> -> vector<64x400xf32>
    %c0_3 = arith.constant 0 : index
    %c0_4 = arith.constant 0 : index
    %4 = vector.load %arg3[%c0_3, %c0_4] : memref<1x400xf32, #tpu.memory_space<vmem>>, vector<1x400xf32>
    %5 = vector.broadcast %4 : vector<1x400xf32> to vector<64x400xf32>
    %6 = arith.addf %3, %5 : vector<64x400xf32>
    %cst_5 = arith.constant 0.000000e+00 : f32
    %7 = vector.broadcast %cst_5 : f32 to vector<64x400xf32>
    %8 = arith.maximumf %6, %7 : vector<64x400xf32>
    %9 = arith.truncf %8 : vector<64x400xf32> to vector<64x400xbf16>
    %c0_6 = arith.constant 0 : index
    %c0_7 = arith.constant 0 : index
    %10 = vector.load %arg4[%c0_6, %c0_7] : memref<400x800xbf16, #tpu.memory_space<vmem>>, vector<400x800xbf16>
    %cst_8 = arith.constant dense<0.000000e+00> : vector<64x800xf32>
    %11 = tpu.matmul %9, %10, %cst_8 {dimension_numbers = #tpu.dot_dimension_numbers<[1], [0], [0], [1], [0, 0, 1, 1], [], []>} : vector<64x400xbf16>, vector<400x800xbf16>, vector<64x800xf32> -> vector<64x800xf32>
    %c0_9 = arith.constant 0 : index
    %c0_10 = arith.constant 0 : index
    %12 = vector.load %arg5[%c0_9, %c0_10] : memref<1x800xf32, #tpu.memory_space<vmem>>, vector<1x800xf32>
    %13 = vector.broadcast %12 : vector<1x800xf32> to vector<64x800xf32>
    %14 = arith.addf %11, %13 : vector<64x800xf32>
    %cst_11 = arith.constant 0.000000e+00 : f32
    %15 = vector.broadcast %cst_11 : f32 to vector<64x800xf32>
    %16 = arith.maximumf %14, %15 : vector<64x800xf32>
    %17 = arith.truncf %16 : vector<64x800xf32> to vector<64x800xbf16>
    %c0_12 = arith.constant 0 : index
    %c0_13 = arith.constant 0 : index
    %18 = vector.load %arg6[%c0_12, %c0_13] : memref<800x128xbf16, #tpu.memory_space<vmem>>, vector<800x128xbf16>
    %cst_14 = arith.constant dense<0.000000e+00> : vector<64x128xf32>
    %19 = tpu.matmul %17, %18, %cst_14 {dimension_numbers = #tpu.dot_dimension_numbers<[1], [0], [0], [1], [0, 0, 1, 1], [], []>} : vector<64x800xbf16>, vector<800x128xbf16>, vector<64x128xf32> -> vector<64x128xf32>
    %c0_15 = arith.constant 0 : index
    %c0_16 = arith.constant 0 : index
    %20 = vector.load %arg7[%c0_15, %c0_16] : memref<1x128xf32, #tpu.memory_space<vmem>>, vector<1x128xf32>
    %21 = vector.broadcast %20 : vector<1x128xf32> to vector<64x128xf32>
    %22 = arith.addf %19, %21 : vector<64x128xf32>
    %cst_17 = arith.constant dense<0xFF800000> : vector<64xf32>
    %23 = vector.multi_reduction <maximumf>, %22, %cst_17 [1] : vector<64x128xf32> to vector<64xf32>
    %24 = vector.shape_cast %23 : vector<64xf32> to vector<64x1xf32>
    %25 = vector.broadcast %24 : vector<64x1xf32> to vector<64x128xf32>
    %26 = arith.subf %22, %25 : vector<64x128xf32>
    %27 = math.exp %26 : vector<64x128xf32>
    %cst_18 = arith.constant dense<0.000000e+00> : vector<64xf32>
    %28 = vector.multi_reduction <add>, %27, %cst_18 [1] : vector<64x128xf32> to vector<64xf32>
    %29 = vector.shape_cast %28 : vector<64xf32> to vector<64x1xf32>
    %30 = math.log %29 : vector<64x1xf32>
    %31 = vector.broadcast %30 : vector<64x1xf32> to vector<64x128xf32>
    %32 = arith.subf %26, %31 : vector<64x128xf32>
    %c0_19 = arith.constant 0 : index
    %c0_20 = arith.constant 0 : index
    %33 = vector.load %arg8[%c0_19, %c0_20] : memref<64x128xf32, #tpu.memory_space<vmem>>, vector<64x128xf32>
    tpu.vector_store %arg8[%c0_19, %c0_20], %32 {strides = array<i32>} : memref<64x128xf32, #tpu.memory_space<vmem>>, vector<64x128xf32>,
    return
  }
  func.func @transform_0(%arg0: i32) -> (i32, i32) {
    %c0_i32 = arith.constant 0 : i32
    %c0_i32_0 = arith.constant 0 : i32
    return %arg0, %c0_i32 : i32, i32
  }
  func.func @transform_1(%arg0: i32) -> (i32, i32) {
    %c0_i32 = arith.constant 0 : i32
    %c0_i32_0 = arith.constant 0 : i32
    %c0_i32_1 = arith.constant 0 : i32
    return %c0_i32, %c0_i32_0 : i32, i32
  }
  func.func @transform_2(%arg0: i32) -> (i32, i32) {
    %c0_i32 = arith.constant 0 : i32
    %c0_i32_0 = arith.constant 0 : i32
    %c0_i32_1 = arith.constant 0 : i32
    return %c0_i32, %c0_i32_0 : i32, i32
  }
  func.func @transform_3(%arg0: i32) -> (i32, i32) {
    %c0_i32 = arith.constant 0 : i32
    %c0_i32_0 = arith.constant 0 : i32
    %c0_i32_1 = arith.constant 0 : i32
    return %c0_i32, %c0_i32_0 : i32, i32
  }
  func.func @transform_4(%arg0: i32) -> (i32, i32) {
    %c0_i32 = arith.constant 0 : i32
    %c0_i32_0 = arith.constant 0 : i32
    %c0_i32_1 = arith.constant 0 : i32
    return %c0_i32, %c0_i32_0 : i32, i32
  }
  func.func @transform_5(%arg0: i32) -> (i32, i32) {
    %c0_i32 = arith.constant 0 : i32
    %c0_i32_0 = arith.constant 0 : i32
    %c0_i32_1 = arith.constant 0 : i32
    return %c0_i32, %c0_i32_0 : i32, i32
  }
  func.func @transform_6(%arg0: i32) -> (i32, i32) {
    %c0_i32 = arith.constant 0 : i32
    %c0_i32_0 = arith.constant 0 : i32
    %c0_i32_1 = arith.constant 0 : i32
    return %c0_i32, %c0_i32_0 : i32, i32
  }
  func.func @transform_7(%arg0: i32) -> (i32, i32) {
    %c0_i32 = arith.constant 0 : i32
    %c0_i32_0 = arith.constant 0 : i32
    return %arg0, %c0_i32 : i32, i32
  }
}

</mosaic_0001>

<llo_original>
// kernel: model_forward.1
$region0: #{model_forward.1}
  #allocation0 [shape = 'u32[]', space=smem, size = 0x4, offset = 0x4, fixed_abs, tag = 'smem constant byte address 0x4 - core index']
  #allocation1 [shape = 'u32[144,128]{1,0:T(1,128)}', space=vmem, size = 0x12000, scoped, tag = 'internal scratch']
  %s0 = inlined_call_operand.vmem [shape: f32[64,25], index: 0, kind: input, shape index: {}]
  %s1 = inlined_call_operand.vmem [shape: bf16[25,400], index: 1, kind: input, shape index: {}]
  %s2 = inlined_call_operand.vmem [shape: f32[1,400], index: 2, kind: input, shape index: {}]
  %s3 = inlined_call_operand.hbm [shape: bf16[400,800], index: 3, kind: input, shape index: {}]
  %s4 = inlined_call_operand.vmem [shape: f32[1,800], index: 4, kind: input, shape index: {}]
  %s5 = inlined_call_operand.hbm [shape: bf16[800,128], index: 5, kind: input, shape index: {}]
  %s6 = inlined_call_operand.vmem [shape: f32[1,128], index: 6, kind: input, shape index: {}]
  %s7 = inlined_call_operand.vmem [shape: f32[64,128], index: 7, kind: output, shape index: {}]
  %s8 = sld [smem:[#allocation0]]
  $region46: #{model_forward.1} parent=0
    _
  %s10 = ssub.s32 1, %s8
  %s11 = scalar_select 0, %s10, %s8
  $region1: #{model_forward.1} parent=0
    #allocation2 [shape = 'u8[716800]{0}', space=vmem, size = 0xaf000, scoped, tag = 'input window, operand 3, single buffered']
    #allocation3 [shape = 's32[1]{0}', space=sflag, size = 0x4, scoped, tag = 'scoped memory for model_forward.1']
    #allocation4 [shape = 'u8[204800]{0}', space=vmem, size = 0x32000, scoped, tag = 'input window, operand 5, single buffered']
    #allocation5 [shape = 's32[1]{0}', space=sflag, size = 0x4, scoped, tag = 'scoped memory for model_forward.1']
    %12 = vsyncpa [#allocation3], 0
    %13 = vsyncpa [#allocation5], 0
    // Predicated region
    $region2: #{model_forward.1} parent=1 // pred_check
      _
    $region3: #{model_forward.1} parent=1 // pred_check_branch
      %15 = sbr.rel (0) target = $region5
    $region4: #{model_forward.1} parent=1 // pred_region
      _
    $region5: #{model_forward.1} parent=1 // pred_fallthru
      _
    // Predicated region
    $region6: #{model_forward.1} parent=1 // pred_check
      _
    $region7: #{model_forward.1} parent=1 // pred_check_branch
      %17 = sbr.rel (0) target = $region9
    $region8: #{model_forward.1} parent=1 // pred_region
      _
    $region9: #{model_forward.1} parent=1 // pred_fallthru
      _
    // Predicated region
    $region10: #{model_forward.1} parent=1 // pred_check
      _
    $region11: #{model_forward.1} parent=1 // pred_check_branch
      %19 = sbr.rel (0) target = $region13
    $region12: #{model_forward.1} parent=1 // pred_region
      _
    $region13: #{model_forward.1} parent=1 // pred_fallthru
      _
    // Predicated region
    $region14: #{model_forward.1} parent=1 // pred_check
      _
    $region15: #{model_forward.1} parent=1 // pred_check_branch
      %21 = sbr.rel (0) target = $region17
    $region16: #{model_forward.1} parent=1 // pred_region
      %s23 = ssub.s32 22400, 22400
      %24 = vsyncadd [#allocation3], %s23
      %s25 = sshll.u32 [#allocation2], 4
      %s26 = int_to_ptr.vmem [resolvable:$true] %s25
      %31 = dma.hbm_to_vmem [thread:$0]  %s3, 22400, %s26, [#allocation3], 448, 448, 28
    $region17: #{model_forward.1} parent=1 // pred_fallthru
      _
    // Predicated region
    $region18: #{model_forward.1} parent=1 // pred_check
      _
    $region19: #{model_forward.1} parent=1 // pred_check_branch
      %33 = sbr.rel (0) target = $region21
    $region20: #{model_forward.1} parent=1 // pred_region
      _
    $region21: #{model_forward.1} parent=1 // pred_fallthru
      _
    // Predicated region
    $region22: #{model_forward.1} parent=1 // pred_check
      _
    $region23: #{model_forward.1} parent=1 // pred_check_branch
      %35 = sbr.rel (0) target = $region25
    $region24: #{model_forward.1} parent=1 // pred_region
      %s37 = ssub.s32 6400, 6400
      %38 = vsyncadd [#allocation5], %s37
      %s39 = sshll.u32 [#allocation4], 4
      %s40 = int_to_ptr.vmem [resolvable:$true] %s39
      %45 = dma.hbm_to_vmem [thread:$0]  %s5, 6400, %s40, [#allocation5], 64, 64, 4
    $region25: #{model_forward.1} parent=1 // pred_fallthru
      _
    // Predicated region
    $region26: #{model_forward.1} parent=1 // pred_check
      _
    $region27: #{model_forward.1} parent=1 // pred_check_branch
      %47 = sbr.rel (0) target = $region29
    $region28: #{model_forward.1} parent=1 // pred_region
      _
    $region29: #{model_forward.1} parent=1 // pred_fallthru
      _
    // Predicated region
    $region30: #{model_forward.1} parent=1 // pred_check
      _
    $region31: #{model_forward.1} parent=1 // pred_check_branch
      %49 = sbr.rel (0) target = $region33
    $region32: #{model_forward.1} parent=1 // pred_region
      %50 = dma.done [#allocation3], 22400
    $region33: #{model_forward.1} parent=1 // pred_fallthru
      _
    // Predicated region
    $region34: #{model_forward.1} parent=1 // pred_check
      _
    $region35: #{model_forward.1} parent=1 // pred_check_branch
      %52 = sbr.rel (0) target = $region37
    $region36: #{model_forward.1} parent=1 // pred_region
      %53 = dma.done [#allocation5], 6400
    $region37: #{model_forward.1} parent=1 // pred_fallthru
      _
    %v55 = vld [vmem:[%s0] sm:$0xff]
    %v56 = vld [vmem:[%s0 + $0x8] sm:$0xff]
    %v57 = vld [vmem:[%s0 + $0x10] sm:$0xff]
    %v58 = vld [vmem:[%s0 + $0x18] sm:$0xff]
    %v59 = vld [vmem:[%s0 + $0x20] sm:$0xff]
    %v60 = vld [vmem:[%s0 + $0x28] sm:$0xff]
    %v61 = vld [vmem:[%s0 + $0x30] sm:$0xff]
    %v62 = vld [vmem:[%s0 + $0x38] sm:$0xff]
    %v63 = vpack.c.bf16 %v56, %v55
    %v64 = vpack.c.bf16 %v58, %v57
    %v65 = vpack.c.bf16 %v60, %v59
    %v66 = vpack.c.bf16 %v62, %v61
    %v67 = vld [vmem:[%s1] sm:$0xff]
    %v68 = vld [vmem:[%s1 + $0x8] sm:$0xff]
    %v69 = vld [vmem:[%s1 + $0x10] sm:$0xff]
    %v70 = vld [vmem:[%s1 + $0x18] sm:$0xff]
    %v71 = vld [vmem:[%s1 + $0x20] sm:$0xff]
    %v72 = vld [vmem:[%s1 + $0x28] sm:$0xff]
    %v73 = vld [vmem:[%s1 + $0x30] sm:$0x11]
    %v74 = vld [vmem:[%s1 + $0x38] sm:$0x11]
    %v75 = vld [vmem:[%s2] sm:$0xf]
    %v77 = vlaneseq
    %v78 = vshrl.u32 %v77, 7
    %v79 = vsub.s32 0, %v78
    %v80 = vrot.slane %v75, %v79
    %v81 = vlaneseq
    %v82 = vshrl.u32 %v81, 7
    %v83 = vsub.s32 1, %v82
    %v84 = vrot.slane %v75, %v83
    %v85 = vlaneseq
    %v86 = vshrl.u32 %v85, 7
    %v87 = vsub.s32 2, %v86
    %v88 = vrot.slane %v75, %v87
    %v89 = vlaneseq
    %v90 = vshrl.u32 %v89, 7
    %v91 = vsub.s32 3, %v90
    %v92 = vrot.slane %v75, %v91
    %v105 = vunpack.c.l.b16 %v67
    %v106 = vunpack.c.h.b16 %v67
    %v107 = vunpack.c.l.b16 %v68
    %v108 = vunpack.c.h.b16 %v68
    %v109 = vunpack.c.l.b16 %v69
    %v110 = vunpack.c.h.b16 %v69
    %v111 = vunpack.c.l.b16 %v70
    %v112 = vunpack.c.h.b16 %v70
    %v113 = vunpack.c.l.b16 %v71
    %v114 = vunpack.c.h.b16 %v71
    %v115 = vunpack.c.l.b16 %v72
    %v116 = vunpack.c.h.b16 %v72
    %v117 = vunpack.c.l.b16 %v73
    %v118 = vunpack.c.h.b16 %v73
    %v119 = vunpack.c.l.b16 %v74
    %v120 = vunpack.c.h.b16 %v74
    %v121 = vpack.c.b16 %v109, %v105
    %v122 = vpack.c.b16 %v110, %v106
    %v123 = vpack.c.b16 %v111, %v107
    %v124 = vpack.c.b16 %v112, %v108
    %v125 = vpack.c.b16 %v117, %v113
    %v126 = vpack.c.b16 %v118, %v114
    %v127 = vpack.c.b16 %v119, %v115
    %v128 = vpack.c.b16 %v120, %v116
    %vm133 = vcmask 203776
    %v135 = vsel %vm133, %v63, 0
    %v138 = vsel %vm133, %v64, 0
    %v141 = vsel %vm133, %v65, 0
    %v144 = vsel %vm133, %v66, 0
    %vm146 = vcmask 1043456
    %vm147 = vcmask 1044480
    %v148 = vsel %vm146, 4294967295, 65535
    %v149 = vsel %vm147, %v148, 0
    %v151 = vand.u32 %v125, %v149
    %v154 = vand.u32 %v126, %v149
    %v157 = vand.u32 %v127, %v149
    %v160 = vand.u32 %v128, %v149
    %162 = vmatprep.subr.bf16.mxu0 0
    %163 = vmatpush1.bf16.msra.mxu0 0
    %164 = vmatprep.subr.bf16.mxu0 0
    %165 = vmatpush1.bf16.msra.mxu0 0
    %166 = vmatprep.subr.bf16.mxu0 0
    %167 = vmatpush1.bf16.msra.mxu0 0
    %168 = vmatprep.subr.bf16.mxu0 0
    %169 = vmatpush1.bf16.msra.mxu0 0
    %170 = vmatprep.subr.bf16.mxu0 0
    %171 = vmatpush1.bf16.msra.mxu0 0
    %172 = vmatprep.subr.bf16.mxu0 0
    %173 = vmatpush1.bf16.msra.mxu0 0
    %174 = vmatprep.subr.bf16.mxu0 %v154
    %175 = vmatpush1.bf16.msra.mxu0 %v151
    %176 = vmatprep.subr.bf16.mxu0 %v122
    %177 = vmatpush1.bf16.msra.mxu0 %v121
    %178 = vmatprep.subr.bf16.mxu0 0
    %179 = vmatpush2.bf16.msra.mxu0 0
    %180 = vmatprep.subr.bf16.mxu0 0
    %181 = vmatpush2.bf16.msra.mxu0 0
    %182 = vmatprep.subr.bf16.mxu0 0
    %183 = vmatpush2.bf16.msra.mxu0 0
    %184 = vmatprep.subr.bf16.mxu0 0
    %185 = vmatpush2.bf16.msra.mxu0 0
    %186 = vmatprep.subr.bf16.mxu0 0
    %187 = vmatpush2.bf16.msra.mxu0 0
    %188 = vmatprep.subr.bf16.mxu0 0
    %189 = vmatpush2.bf16.msra.mxu0 0
    %190 = vmatprep.subr.bf16.mxu0 0
    %191 = vmatpush2.bf16.msra.mxu0 0
    %192 = vmatprep.subr.bf16.mxu0 0
    %193 = vmatpush2.bf16.msra.mxu0 0
    %194 = vmatprep.mubr.bf16.mxu0 0
    %195 = vmatmul.mubr.bf16.gmra.mxu0 %v135
    %v196 = vpop.f32.mrf.mxu0
    %v197 = vadd.f32 %v80, %v196
    %v198 = vpop.f32.mrf.mxu0
    %v199 = vadd.f32 %v84, %v198
    %v200 = vpop.f32.mrf.mxu0
    %v201 = vadd.f32 %v80, %v200
    %v202 = vpop.f32.mrf.mxu0
    %v203 = vadd.f32 %v84, %v202
    %204 = vmatprep.mubr.bf16.mxu0 0
    %205 = vmatmul.mubr.bf16.gmra.mxu0 %v138
    %v206 = vpop.f32.mrf.mxu0
    %v207 = vadd.f32 %v80, %v206
    %v208 = vpop.f32.mrf.mxu0
    %v209 = vadd.f32 %v84, %v208
    %v210 = vpop.f32.mrf.mxu0
    %v211 = vadd.f32 %v80, %v210
    %v212 = vpop.f32.mrf.mxu0
    %v213 = vadd.f32 %v84, %v212
    %214 = vmatprep.mubr.bf16.mxu0 0
    %215 = vmatmul.mubr.bf16.gmra.mxu0 %v141
    %v216 = vpop.f32.mrf.mxu0
    %v217 = vadd.f32 %v80, %v216
    %v218 = vpop.f32.mrf.mxu0
    %v219 = vadd.f32 %v84, %v218
    %v220 = vpop.f32.mrf.mxu0
    %v221 = vadd.f32 %v80, %v220
    %v222 = vpop.f32.mrf.mxu0
    %v223 = vadd.f32 %v84, %v222
    %224 = vmatprep.mubr.bf16.mxu0 0
    %225 = vmatmul.mubr.bf16.gmra.mxu0 %v144
    %v226 = vpop.f32.mrf.mxu0
    %v227 = vadd.f32 %v80, %v226
    %v228 = vpop.f32.mrf.mxu0
    %v229 = vadd.f32 %v84, %v228
    %v230 = vpop.f32.mrf.mxu0
    %v231 = vadd.f32 %v80, %v230
    %v232 = vpop.f32.mrf.mxu0
    %v233 = vadd.f32 %v84, %v232
    %234 = vdwg.mxu0
    %235 = vmatprep.subr.bf16.mxu0 0
    %236 = vmatpush1.bf16.msra.mxu0 0
    %237 = vmatprep.subr.bf16.mxu0 0
    %238 = vmatpush1.bf16.msra.mxu0 0
    %239 = vmatprep.subr.bf16.mxu0 0
    %240 = vmatpush1.bf16.msra.mxu0 0
    %241 = vmatprep.subr.bf16.mxu0 0
    %242 = vmatpush1.bf16.msra.mxu0 0
    %243 = vmatprep.subr.bf16.mxu0 0
    %244 = vmatpush1.bf16.msra.mxu0 0
    %245 = vmatprep.subr.bf16.mxu0 0
    %246 = vmatpush1.bf16.msra.mxu0 0
    %247 = vmatprep.subr.bf16.mxu0 %v160
    %248 = vmatpush1.bf16.msra.mxu0 %v157
    %249 = vmatprep.subr.bf16.mxu0 %v124
    %250 = vmatpush1.bf16.msra.mxu0 %v123
    %251 = vmatprep.subr.bf16.mxu0 0
    %252 = vmatpush2.bf16.msra.mxu0 0
    %253 = vmatprep.subr.bf16.mxu0 0
    %254 = vmatpush2.bf16.msra.mxu0 0
    %255 = vmatprep.subr.bf16.mxu0 0
    %256 = vmatpush2.bf16.msra.mxu0 0
    %257 = vmatprep.subr.bf16.mxu0 0
    %258 = vmatpush2.bf16.msra.mxu0 0
    %259 = vmatprep.subr.bf16.mxu0 0
    %260 = vmatpush2.bf16.msra.mxu0 0
    %261 = vmatprep.subr.bf16.mxu0 0
    %262 = vmatpush2.bf16.msra.mxu0 0
    %263 = vmatprep.subr.bf16.mxu0 0
    %264 = vmatpush2.bf16.msra.mxu0 0
    %265 = vmatprep.subr.bf16.mxu0 0
    %266 = vmatpush2.bf16.msra.mxu0 0
    %267 = vmatprep.mubr.bf16.mxu0 0
    %268 = vmatmul.mubr.bf16.gmra.mxu0 %v135
    %v269 = vpop.f32.mrf.mxu0
    %v270 = vadd.f32 %v88, %v269
    %v271 = vpop.f32.mrf.mxu0
    %v272 = vadd.f32 %v92, %v271
    %v273 = vpop.f32.mrf.mxu0
    %v274 = vadd.f32 %v88, %v273
    %v275 = vpop.f32.mrf.mxu0
    %v276 = vadd.f32 %v92, %v275
    %277 = vmatprep.mubr.bf16.mxu0 0
    %278 = vmatmul.mubr.bf16.gmra.mxu0 %v138
    %v279 = vpop.f32.mrf.mxu0
    %v280 = vadd.f32 %v88, %v279
    %v281 = vpop.f32.mrf.mxu0
    %v282 = vadd.f32 %v92, %v281
    %v283 = vpop.f32.mrf.mxu0
    %v284 = vadd.f32 %v88, %v283
    %v285 = vpop.f32.mrf.mxu0
    %v286 = vadd.f32 %v92, %v285
    %287 = vmatprep.mubr.bf16.mxu0 0
    %288 = vmatmul.mubr.bf16.gmra.mxu0 %v141
    %v289 = vpop.f32.mrf.mxu0
    %v290 = vadd.f32 %v88, %v289
    %v291 = vpop.f32.mrf.mxu0
    %v292 = vadd.f32 %v92, %v291
    %v293 = vpop.f32.mrf.mxu0
    %v294 = vadd.f32 %v88, %v293
    %v295 = vpop.f32.mrf.mxu0
    %v296 = vadd.f32 %v92, %v295
    %297 = vmatprep.mubr.bf16.mxu0 0
    %298 = vmatmul.mubr.bf16.gmra.mxu0 %v144
    %v299 = vpop.f32.mrf.mxu0
    %v300 = vadd.f32 %v88, %v299
    %v301 = vpop.f32.mrf.mxu0
    %v302 = vadd.f32 %v92, %v301
    %v303 = vpop.f32.mrf.mxu0
    %v304 = vadd.f32 %v88, %v303
    %v305 = vpop.f32.mrf.mxu0
    %v306 = vadd.f32 %v92, %v305
    %307 = vdwg.mxu0
    %v308 = vmax.f32 %v197, 0.0
    %v309 = vmax.f32 %v199, 0.0
    %v310 = vmax.f32 %v270, 0.0
    %v311 = vmax.f32 %v272, 0.0
    %v312 = vmax.f32 %v201, 0.0
    %v313 = vmax.f32 %v203, 0.0
    %v314 = vmax.f32 %v274, 0.0
    %v315 = vmax.f32 %v276, 0.0
    %v316 = vmax.f32 %v207, 0.0
    %v317 = vmax.f32 %v209, 0.0
    %v318 = vmax.f32 %v280, 0.0
    %v319 = vmax.f32 %v282, 0.0
    %v320 = vmax.f32 %v211, 0.0
    %v321 = vmax.f32 %v213, 0.0
    %v322 = vmax.f32 %v284, 0.0
    %v323 = vmax.f32 %v286, 0.0
    %v324 = vmax.f32 %v217, 0.0
    %v325 = vmax.f32 %v219, 0.0
    %v326 = vmax.f32 %v290, 0.0
    %v327 = vmax.f32 %v292, 0.0
    %v328 = vmax.f32 %v221, 0.0
    %v329 = vmax.f32 %v223, 0.0
    %v330 = vmax.f32 %v294, 0.0
    %v331 = vmax.f32 %v296, 0.0
    %v332 = vmax.f32 %v227, 0.0
    %v333 = vmax.f32 %v229, 0.0
    %v334 = vmax.f32 %v300, 0.0
    %v335 = vmax.f32 %v302, 0.0
    %v336 = vmax.f32 %v231, 0.0
    %v337 = vmax.f32 %v233, 0.0
    %v338 = vmax.f32 %v304, 0.0
    %v339 = vmax.f32 %v306, 0.0
    %v340 = vpack.c.bf16 %v312, %v308
    %v341 = vpack.c.bf16 %v313, %v309
    %v342 = vpack.c.bf16 %v314, %v310
    %v343 = vpack.c.bf16 %v315, %v311
    %v344 = vpack.c.bf16 %v320, %v316
    %v345 = vpack.c.bf16 %v321, %v317
    %v346 = vpack.c.bf16 %v322, %v318
    %v347 = vpack.c.bf16 %v323, %v319
    %v348 = vpack.c.bf16 %v328, %v324
    %v349 = vpack.c.bf16 %v329, %v325
    %v350 = vpack.c.bf16 %v330, %v326
    %v351 = vpack.c.bf16 %v331, %v327
    %v352 = vpack.c.bf16 %v336, %v332
    %v353 = vpack.c.bf16 %v337, %v333
    %v354 = vpack.c.bf16 %v338, %v334
    %v355 = vpack.c.bf16 %v339, %v335
    %v356 = vld [vmem:[#allocation2] sm:$0xff]
    %v357 = vld [vmem:[#allocation2 + $0x8] sm:$0xff]
    %v358 = vld [vmem:[#allocation2 + $0x10] sm:$0xff]
    %v359 = vld [vmem:[#allocation2 + $0x18] sm:$0xf]
    %v360 = vld [vmem:[#allocation2 + $0x1c] sm:$0xff]
    %v361 = vld [vmem:[#allocation2 + $0x24] sm:$0xff]
    %v362 = vld [vmem:[#allocation2 + $0x2c] sm:$0xff]
    %v363 = vld [vmem:[#allocation2 + $0x34] sm:$0xf]
    %v364 = vld [vmem:[#allocation2 + $0x38] sm:$0xff]
    %v365 = vld [vmem:[#allocation2 + $0x40] sm:$0xff]
    %v366 = vld [vmem:[#allocation2 + $0x48] sm:$0xff]
    %v367 = vld [vmem:[#allocation2 + $0x50] sm:$0xf]
    %v368 = vld [vmem:[#allocation2 + $0x54] sm:$0xff]
    %v369 = vld [vmem:[#allocation2 + $0x5c] sm:$0xff]
    %v370 = vld [vmem:[#allocation2 + $0x64] sm:$0xff]
    %v371 = vld [vmem:[#allocation2 + $0x6c] sm:$0xf]
    %v372 = vld [vmem:[#allocation2 + $0x70] sm:$0xff]
    %v373 = vld [vmem:[#allocation2 + $0x78] sm:$0xff]
    %v374 = vld [vmem:[#allocation2 + $0x80] sm:$0xff]
    %v375 = vld [vmem:[#allocation2 + $0x88] sm:$0xf]
    %v376 = vld [vmem:[#allocation2 + $0x8c] sm:$0xff]
    %v377 = vld [vmem:[#allocation2 + $0x94] sm:$0xff]
    %v378 = vld [vmem:[#allocation2 + $0x9c] sm:$0xff]
    %v379 = vld [vmem:[#allocation2 + $0xa4] sm:$0xf]
    %v380 = vld [vmem:[#allocation2 + $0xa8] sm:$0xff]
    %v381 = vld [vmem:[#allocation2 + $0xb0] sm:$0xff]
    %v382 = vld [vmem:[#allocation2 + $0xb8] sm:$0xff]
    %v383 = vld [vmem:[#allocation2 + $0xc0] sm:$0xf]
    %v384 = vld [vmem:[#allocation2 + $0xc4] sm:$0xff]
    %v385 = vld [vmem:[#allocation2 + $0xcc] sm:$0xff]
    %v386 = vld [vmem:[#allocation2 + $0xd4] sm:$0xff]
    %v387 = vld [vmem:[#allocation2 + $0xdc] sm:$0xf]
    %v388 = vld [vmem:[#allocation2 + $0xe0] sm:$0xff]
    %v389 = vld [vmem:[#allocation2 + $0xe8] sm:$0xff]
    %v390 = vld [vmem:[#allocation2 + $0xf0] sm:$0xff]
    %v391 = vld [vmem:[#allocation2 + $0xf8] sm:$0xf]
    %v392 = vld [vmem:[#allocation2 + $0xfc] sm:$0xff]
    %v393 = vld [vmem:[#allocation2 + $0x104] sm:$0xff]
    %v394 = vld [vmem:[#allocation2 + $0x10c] sm:$0xff]
    %v395 = vld [vmem:[#allocation2 + $0x114] sm:$0xf]
    %v396 = vld [vmem:[#allocation2 + $0x118] sm:$0xff]
    %v397 = vld [vmem:[#allocation2 + $0x120] sm:$0xff]
    %v398 = vld [vmem:[#allocation2 + $0x128] sm:$0xff]
    %v399 = vld [vmem:[#allocation2 + $0x130] sm:$0xf]
    %v400 = vld [vmem:[#allocation2 + $0x134] sm:$0xff]
    %v401 = vld [vmem:[#allocation2 + $0x13c] sm:$0xff]
    %v402 = vld [vmem:[#allocation2 + $0x144] sm:$0xff]
    %v403 = vld [vmem:[#allocation2 + $0x14c] sm:$0xf]
    %v404 = vld [vmem:[#allocation2 + $0x150] sm:$0xff]
    %v405 = vld [vmem:[#allocation2 + $0x158] sm:$0xff]
    %v406 = vld [vmem:[#allocation2 + $0x160] sm:$0xff]
    %v407 = vld [vmem:[#allocation2 + $0x168] sm:$0xf]
    %v408 = vld [vmem:[#allocation2 + $0x16c] sm:$0xff]
    %v409 = vld [vmem:[#allocation2 + $0x174] sm:$0xff]
    %v410 = vld [vmem:[#allocation2 + $0x17c] sm:$0xff]
    %v411 = vld [vmem:[#allocation2 + $0x184] sm:$0xf]
    %v412 = vld [vmem:[#allocation2 + $0x188] sm:$0xff]
    %v413 = vld [vmem:[#allocation2 + $0x190] sm:$0xff]
    %v414 = vld [vmem:[#allocation2 + $0x198] sm:$0xff]
    %v415 = vld [vmem:[#allocation2 + $0x1a0] sm:$0xf]
    %v416 = vld [vmem:[#allocation2 + $0x1a4] sm:$0xff]
    %v417 = vld [vmem:[#allocation2 + $0x1ac] sm:$0xff]
    %v418 = vld [vmem:[#allocation2 + $0x1b4] sm:$0xff]
    %v419 = vld [vmem:[#allocation2 + $0x1bc] sm:$0xf]
    %v420 = vld [vmem:[#allocation2 + $0x1c0] sm:$0xff]
    %v421 = vld [vmem:[#allocation2 + $0x1c8] sm:$0xff]
    %v422 = vld [vmem:[#allocation2 + $0x1d0] sm:$0xff]
    %v423 = vld [vmem:[#allocation2 + $0x1d8] sm:$0xf]
    %v424 = vld [vmem:[#allocation2 + $0x1dc] sm:$0xff]
    %v425 = vld [vmem:[#allocation2 + $0x1e4] sm:$0xff]
    %v426 = vld [vmem:[#allocation2 + $0x1ec] sm:$0xff]
    %v427 = vld [vmem:[#allocation2 + $0x1f4] sm:$0xf]
    %v428 = vld [vmem:[#allocation2 + $0x1f8] sm:$0xff]
    %v429 = vld [vmem:[#allocation2 + $0x200] sm:$0xff]
    %v430 = vld [vmem:[#allocation2 + $0x208] sm:$0xff]
    %v431 = vld [vmem:[#allocation2 + $0x210] sm:$0xf]
    %v432 = vld [vmem:[#allocation2 + $0x214] sm:$0xff]
    %v433 = vld [vmem:[#allocation2 + $0x21c] sm:$0xff]
    %v434 = vld [vmem:[#allocation2 + $0x224] sm:$0xff]
    %v435 = vld [vmem:[#allocation2 + $0x22c] sm:$0xf]
    %v436 = vld [vmem:[#allocation2 + $0x230] sm:$0xff]
    %v437 = vld [vmem:[#allocation2 + $0x238] sm:$0xff]
    %v438 = vld [vmem:[#allocation2 + $0x240] sm:$0xff]
    %v439 = vld [vmem:[#allocation2 + $0x248] sm:$0xf]
    %v440 = vld [vmem:[#allocation2 + $0x24c] sm:$0xff]
    %v441 = vld [vmem:[#allocation2 + $0x254] sm:$0xff]
    %v442 = vld [vmem:[#allocation2 + $0x25c] sm:$0xff]
    %v443 = vld [vmem:[#allocation2 + $0x264] sm:$0xf]
    %v444 = vld [vmem:[#allocation2 + $0x268] sm:$0xff]
    %v445 = vld [vmem:[#allocation2 + $0x270] sm:$0xff]
    %v446 = vld [vmem:[#allocation2 + $0x278] sm:$0xff]
    %v447 = vld [vmem:[#allocation2 + $0x280] sm:$0xf]
    %v448 = vld [vmem:[#allocation2 + $0x284] sm:$0xff]
    %v449 = vld [vmem:[#allocation2 + $0x28c] sm:$0xff]
    %v450 = vld [vmem:[#allocation2 + $0x294] sm:$0xff]
    %v451 = vld [vmem:[#allocation2 + $0x29c] sm:$0xf]
    %v452 = vld [vmem:[#allocation2 + $0x2a0] sm:$0xff]
    %v453 = vld [vmem:[#allocation2 + $0x2a8] sm:$0xff]
    %v454 = vld [vmem:[#allocation2 + $0x2b0] sm:$0xff]
    %v455 = vld [vmem:[#allocation2 + $0x2b8] sm:$0xf]
    %v456 = vld [vmem:[#allocation2 + $0x2bc] sm:$0xff]
    %v457 = vld [vmem:[#allocation2 + $0x2c4] sm:$0xff]
    %v458 = vld [vmem:[#allocation2 + $0x2cc] sm:$0xff]
    %v459 = vld [vmem:[#allocation2 + $0x2d4] sm:$0xf]
    %v460 = vld [vmem:[#allocation2 + $0x2d8] sm:$0xff]
    %v461 = vld [vmem:[#allocation2 + $0x2e0] sm:$0xff]
    %v462 = vld [vmem:[#allocation2 + $0x2e8] sm:$0xff]
    %v463 = vld [vmem:[#allocation2 + $0x2f0] sm:$0xf]
    %v464 = vld [vmem:[#allocation2 + $0x2f4] sm:$0xff]
    %v465 = vld [vmem:[#allocation2 + $0x2fc] sm:$0xff]
    %v466 = vld [vmem:[#allocation2 + $0x304] sm:$0xff]
    %v467 = vld [vmem:[#allocation2 + $0x30c] sm:$0xf]
    %v468 = vld [vmem:[#allocation2 + $0x310] sm:$0xff]
    %v469 = vld [vmem:[#allocation2 + $0x318] sm:$0xff]
    %v470 = vld [vmem:[#allocation2 + $0x320] sm:$0xff]
    %v471 = vld [vmem:[#allocation2 + $0x328] sm:$0xf]
    %v472 = vld [vmem:[#allocation2 + $0x32c] sm:$0xff]
    %v473 = vld [vmem:[#allocation2 + $0x334] sm:$0xff]
    %v474 = vld [vmem:[#allocation2 + $0x33c] sm:$0xff]
    %v475 = vld [vmem:[#allocation2 + $0x344] sm:$0xf]
    %v476 = vld [vmem:[#allocation2 + $0x348] sm:$0xff]
    %v477 = vld [vmem:[#allocation2 + $0x350] sm:$0xff]
    %v478 = vld [vmem:[#allocation2 + $0x358] sm:$0xff]
    %v479 = vld [vmem:[#allocation2 + $0x360] sm:$0xf]
    %v480 = vld [vmem:[#allocation2 + $0x364] sm:$0xff]
    %v481 = vld [vmem:[#allocation2 + $0x36c] sm:$0xff]
    %v482 = vld [vmem:[#allocation2 + $0x374] sm:$0xff]
    %v483 = vld [vmem:[#allocation2 + $0x37c] sm:$0xf]
    %v484 = vld [vmem:[#allocation2 + $0x380] sm:$0xff]
    %v485 = vld [vmem:[#allocation2 + $0x388] sm:$0xff]
    %v486 = vld [vmem:[#allocation2 + $0x390] sm:$0xff]
    %v487 = vld [vmem:[#allocation2 + $0x398] sm:$0xf]
    %v488 = vld [vmem:[#allocation2 + $0x39c] sm:$0xff]
    %v489 = vld [vmem:[#allocation2 + $0x3a4] sm:$0xff]
    %v490 = vld [vmem:[#allocation2 + $0x3ac] sm:$0xff]
    %v491 = vld [vmem:[#allocation2 + $0x3b4] sm:$0xf]
    %v492 = vld [vmem:[#allocation2 + $0x3b8] sm:$0xff]
    %v493 = vld [vmem:[#allocation2 + $0x3c0] sm:$0xff]
    %v494 = vld [vmem:[#allocation2 + $0x3c8] sm:$0xff]
    %v495 = vld [vmem:[#allocation2 + $0x3d0] sm:$0xf]
    %v496 = vld [vmem:[#allocation2 + $0x3d4] sm:$0xff]
    %v497 = vld [vmem:[#allocation2 + $0x3dc] sm:$0xff]
    %v498 = vld [vmem:[#allocation2 + $0x3e4] sm:$0xff]
    %v499 = vld [vmem:[#allocation2 + $0x3ec] sm:$0xf]
    %v500 = vld [vmem:[#allocation2 + $0x3f0] sm:$0xff]
    %v501 = vld [vmem:[#allocation2 + $0x3f8] sm:$0xff]
    %v502 = vld [vmem:[#allocation2 + $0x400] sm:$0xff]
    %v503 = vld [vmem:[#allocation2 + $0x408] sm:$0xf]
    %v504 = vld [vmem:[#allocation2 + $0x40c] sm:$0xff]
    %v505 = vld [vmem:[#allocation2 + $0x414] sm:$0xff]
    %v506 = vld [vmem:[#allocation2 + $0x41c] sm:$0xff]
    %v507 = vld [vmem:[#allocation2 + $0x424] sm:$0xf]
    %v508 = vld [vmem:[#allocation2 + $0x428] sm:$0xff]
    %v509 = vld [vmem:[#allocation2 + $0x430] sm:$0xff]
    %v510 = vld [vmem:[#allocation2 + $0x438] sm:$0xff]
    %v511 = vld [vmem:[#allocation2 + $0x440] sm:$0xf]
    %v512 = vld [vmem:[#allocation2 + $0x444] sm:$0xff]
    %v513 = vld [vmem:[#allocation2 + $0x44c] sm:$0xff]
    %v514 = vld [vmem:[#allocation2 + $0x454] sm:$0xff]
    %v515 = vld [vmem:[#allocation2 + $0x45c] sm:$0xf]
    %v516 = vld [vmem:[#allocation2 + $0x460] sm:$0xff]
    %v517 = vld [vmem:[#allocation2 + $0x468] sm:$0xff]
    %v518 = vld [vmem:[#allocation2 + $0x470] sm:$0xff]
    %v519 = vld [vmem:[#allocation2 + $0x478] sm:$0xf]
    %v520 = vld [vmem:[#allocation2 + $0x47c] sm:$0xff]
    %v521 = vld [vmem:[#allocation2 + $0x484] sm:$0xff]
    %v522 = vld [vmem:[#allocation2 + $0x48c] sm:$0xff]
    %v523 = vld [vmem:[#allocation2 + $0x494] sm:$0xf]
    %v524 = vld [vmem:[#allocation2 + $0x498] sm:$0xff]
    %v525 = vld [vmem:[#allocation2 + $0x4a0] sm:$0xff]
    %v526 = vld [vmem:[#allocation2 + $0x4a8] sm:$0xff]
    %v527 = vld [vmem:[#allocation2 + $0x4b0] sm:$0xf]
    %v528 = vld [vmem:[#allocation2 + $0x4b4] sm:$0xff]
    %v529 = vld [vmem:[#allocation2 + $0x4bc] sm:$0xff]
    %v530 = vld [vmem:[#allocation2 + $0x4c4] sm:$0xff]
    %v531 = vld [vmem:[#allocation2 + $0x4cc] sm:$0xf]
    %v532 = vld [vmem:[#allocation2 + $0x4d0] sm:$0xff]
    %v533 = vld [vmem:[#allocation2 + $0x4d8] sm:$0xff]
    %v534 = vld [vmem:[#allocation2 + $0x4e0] sm:$0xff]
    %v535 = vld [vmem:[#allocation2 + $0x4e8] sm:$0xf]
    %v536 = vld [vmem:[#allocation2 + $0x4ec] sm:$0xff]
    %v537 = vld [vmem:[#allocation2 + $0x4f4] sm:$0xff]
    %v538 = vld [vmem:[#allocation2 + $0x4fc] sm:$0xff]
    %v539 = vld [vmem:[#allocation2 + $0x504] sm:$0xf]
    %v540 = vld [vmem:[#allocation2 + $0x508] sm:$0xff]
    %v541 = vld [vmem:[#allocation2 + $0x510] sm:$0xff]
    %v542 = vld [vmem:[#allocation2 + $0x518] sm:$0xff]
    %v543 = vld [vmem:[#allocation2 + $0x520] sm:$0xf]
    %v544 = vld [vmem:[#allocation2 + $0x524] sm:$0xff]
    %v545 = vld [vmem:[#allocation2 + $0x52c] sm:$0xff]
    %v546 = vld [vmem:[#allocation2 + $0x534] sm:$0xff]
    %v547 = vld [vmem:[#allocation2 + $0x53c] sm:$0xf]
    %v548 = vld [vmem:[#allocation2 + $0x540] sm:$0xff]
    %v549 = vld [vmem:[#allocation2 + $0x548] sm:$0xff]
    %v550 = vld [vmem:[#allocation2 + $0x550] sm:$0xff]
    %v551 = vld [vmem:[#allocation2 + $0x558] sm:$0xf]
    %v552 = vld [vmem:[#allocation2 + $0x55c] sm:$0xff]
    %v553 = vld [vmem:[#allocation2 + $0x564] sm:$0xff]
    %v554 = vld [vmem:[#allocation2 + $0x56c] sm:$0xff]
    %v555 = vld [vmem:[#allocation2 + $0x574] sm:$0xf]
    %v556 = vld [vmem:[%s4] sm:$0x7f]
    %v558 = vlaneseq
    %v559 = vshrl.u32 %v558, 7
    %v560 = vsub.s32 0, %v559
    %v561 = vrot.slane %v556, %v560
    %v562 = vlaneseq
    %v563 = vshrl.u32 %v562, 7
    %v564 = vsub.s32 1, %v563
    %v565 = vrot.slane %v556, %v564
    %v566 = vlaneseq
    %v567 = vshrl.u32 %v566, 7
    %v568 = vsub.s32 2, %v567
    %v569 = vrot.slane %v556, %v568
    %v570 = vlaneseq
    %v571 = vshrl.u32 %v570, 7
    %v572 = vsub.s32 3, %v571
    %v573 = vrot.slane %v556, %v572
    %v574 = vlaneseq
    %v575 = vshrl.u32 %v574, 7
    %v576 = vsub.s32 4, %v575
    %v577 = vrot.slane %v556, %v576
    %v578 = vlaneseq
    %v579 = vshrl.u32 %v578, 7
    %v580 = vsub.s32 5, %v579
    %v581 = vrot.slane %v556, %v580
    %v582 = vlaneseq
    %v583 = vshrl.u32 %v582, 7
    %v584 = vsub.s32 6, %v583
    %v585 = vrot.slane %v556, %v584
    %v793 = vunpack.c.l.b16 %v356
    %v794 = vunpack.c.h.b16 %v356
    %v795 = vunpack.c.l.b16 %v357
    %v796 = vunpack.c.h.b16 %v357
    %v797 = vunpack.c.l.b16 %v358
    %v798 = vunpack.c.h.b16 %v358
    %v799 = vunpack.c.l.b16 %v359
    %v800 = vunpack.c.l.b16 %v360
    %v801 = vunpack.c.h.b16 %v360
    %v802 = vunpack.c.l.b16 %v361
    %v803 = vunpack.c.h.b16 %v361
    %v804 = vunpack.c.l.b16 %v362
    %v805 = vunpack.c.h.b16 %v362
    %v806 = vunpack.c.l.b16 %v363
    %v807 = vunpack.c.l.b16 %v364
    %v808 = vunpack.c.h.b16 %v364
    %v809 = vunpack.c.l.b16 %v365
    %v810 = vunpack.c.h.b16 %v365
    %v811 = vunpack.c.l.b16 %v366
    %v812 = vunpack.c.h.b16 %v366
    %v813 = vunpack.c.l.b16 %v367
    %v814 = vunpack.c.l.b16 %v368
    %v815 = vunpack.c.h.b16 %v368
    %v816 = vunpack.c.l.b16 %v369
    %v817 = vunpack.c.h.b16 %v369
    %v818 = vunpack.c.l.b16 %v370
    %v819 = vunpack.c.h.b16 %v370
    %v820 = vunpack.c.l.b16 %v371
    %v821 = vunpack.c.l.b16 %v372
    %v822 = vunpack.c.h.b16 %v372
    %v823 = vunpack.c.l.b16 %v373
    %v824 = vunpack.c.h.b16 %v373
    %v825 = vunpack.c.l.b16 %v374
    %v826 = vunpack.c.h.b16 %v374
    %v827 = vunpack.c.l.b16 %v375
    %v828 = vunpack.c.l.b16 %v376
    %v829 = vunpack.c.h.b16 %v376
    %v830 = vunpack.c.l.b16 %v377
    %v831 = vunpack.c.h.b16 %v377
    %v832 = vunpack.c.l.b16 %v378
    %v833 = vunpack.c.h.b16 %v378
    %v834 = vunpack.c.l.b16 %v379
    %v835 = vunpack.c.l.b16 %v380
    %v836 = vunpack.c.h.b16 %v380
    %v837 = vunpack.c.l.b16 %v381
    %v838 = vunpack.c.h.b16 %v381
    %v839 = vunpack.c.l.b16 %v382
    %v840 = vunpack.c.h.b16 %v382
    %v841 = vunpack.c.l.b16 %v383
    %v842 = vunpack.c.l.b16 %v384
    %v843 = vunpack.c.h.b16 %v384
    %v844 = vunpack.c.l.b16 %v385
    %v845 = vunpack.c.h.b16 %v385
    %v846 = vunpack.c.l.b16 %v386
    %v847 = vunpack.c.h.b16 %v386
    %v848 = vunpack.c.l.b16 %v387
    %v849 = vunpack.c.l.b16 %v388
    %v850 = vunpack.c.h.b16 %v388
    %v851 = vunpack.c.l.b16 %v389
    %v852 = vunpack.c.h.b16 %v389
    %v853 = vunpack.c.l.b16 %v390
    %v854 = vunpack.c.h.b16 %v390
    %v855 = vunpack.c.l.b16 %v391
    %v856 = vunpack.c.l.b16 %v392
    %v857 = vunpack.c.h.b16 %v392
    %v858 = vunpack.c.l.b16 %v393
    %v859 = vunpack.c.h.b16 %v393
    %v860 = vunpack.c.l.b16 %v394
    %v861 = vunpack.c.h.b16 %v394
    %v862 = vunpack.c.l.b16 %v395
    %v863 = vunpack.c.l.b16 %v396
    %v864 = vunpack.c.h.b16 %v396
    %v865 = vunpack.c.l.b16 %v397
    %v866 = vunpack.c.h.b16 %v397
    %v867 = vunpack.c.l.b16 %v398
    %v868 = vunpack.c.h.b16 %v398
    %v869 = vunpack.c.l.b16 %v399
    %v870 = vunpack.c.l.b16 %v400
    %v871 = vunpack.c.h.b16 %v400
    %v872 = vunpack.c.l.b16 %v401
    %v873 = vunpack.c.h.b16 %v401
    %v874 = vunpack.c.l.b16 %v402
    %v875 = vunpack.c.h.b16 %v402
    %v876 = vunpack.c.l.b16 %v403
    %v877 = vunpack.c.l.b16 %v404
    %v878 = vunpack.c.h.b16 %v404
    %v879 = vunpack.c.l.b16 %v405
    %v880 = vunpack.c.h.b16 %v405
    %v881 = vunpack.c.l.b16 %v406
    %v882 = vunpack.c.h.b16 %v406
    %v883 = vunpack.c.l.b16 %v407
    %v884 = vunpack.c.l.b16 %v408
    %v885 = vunpack.c.h.b16 %v408
    %v886 = vunpack.c.l.b16 %v409
    %v887 = vunpack.c.h.b16 %v409
    %v888 = vunpack.c.l.b16 %v410
    %v889 = vunpack.c.h.b16 %v410
    %v890 = vunpack.c.l.b16 %v411
    %v891 = vunpack.c.l.b16 %v412
    %v892 = vunpack.c.h.b16 %v412
    %v893 = vunpack.c.l.b16 %v413
    %v894 = vunpack.c.h.b16 %v413
    %v895 = vunpack.c.l.b16 %v414
    %v896 = vunpack.c.h.b16 %v414
    %v897 = vunpack.c.l.b16 %v415
    %v898 = vunpack.c.l.b16 %v416
    %v899 = vunpack.c.h.b16 %v416
    %v900 = vunpack.c.l.b16 %v417
    %v901 = vunpack.c.h.b16 %v417
    %v902 = vunpack.c.l.b16 %v418
    %v903 = vunpack.c.h.b16 %v418
    %v904 = vunpack.c.l.b16 %v419
    %v905 = vunpack.c.l.b16 %v420
    %v906 = vunpack.c.h.b16 %v420
    %v907 = vunpack.c.l.b16 %v421
    %v908 = vunpack.c.h.b16 %v421
    %v909 = vunpack.c.l.b16 %v422
    %v910 = vunpack.c.h.b16 %v422
    %v911 = vunpack.c.l.b16 %v423
    %v912 = vunpack.c.l.b16 %v424
    %v913 = vunpack.c.h.b16 %v424
    %v914 = vunpack.c.l.b16 %v425
    %v915 = vunpack.c.h.b16 %v425
    %v916 = vunpack.c.l.b16 %v426
    %v917 = vunpack.c.h.b16 %v426
    %v918 = vunpack.c.l.b16 %v427
    %v919 = vunpack.c.l.b16 %v428
    %v920 = vunpack.c.h.b16 %v428
    %v921 = vunpack.c.l.b16 %v429
    %v922 = vunpack.c.h.b16 %v429
    %v923 = vunpack.c.l.b16 %v430
    %v924 = vunpack.c.h.b16 %v430
    %v925 = vunpack.c.l.b16 %v431
    %v926 = vunpack.c.l.b16 %v432
    %v927 = vunpack.c.h.b16 %v432
    %v928 = vunpack.c.l.b16 %v433
    %v929 = vunpack.c.h.b16 %v433
    %v930 = vunpack.c.l.b16 %v434
    %v931 = vunpack.c.h.b16 %v434
    %v932 = vunpack.c.l.b16 %v435
    %v933 = vunpack.c.l.b16 %v436
    %v934 = vunpack.c.h.b16 %v436
    %v935 = vunpack.c.l.b16 %v437
    %v936 = vunpack.c.h.b16 %v437
    %v937 = vunpack.c.l.b16 %v438
    %v938 = vunpack.c.h.b16 %v438
    %v939 = vunpack.c.l.b16 %v439
    %v940 = vunpack.c.l.b16 %v440
    %v941 = vunpack.c.h.b16 %v440
    %v942 = vunpack.c.l.b16 %v441
    %v943 = vunpack.c.h.b16 %v441
    %v944 = vunpack.c.l.b16 %v442
    %v945 = vunpack.c.h.b16 %v442
    %v946 = vunpack.c.l.b16 %v443
    %v947 = vunpack.c.l.b16 %v444
    %v948 = vunpack.c.h.b16 %v444
    %v949 = vunpack.c.l.b16 %v445
    %v950 = vunpack.c.h.b16 %v445
    %v951 = vunpack.c.l.b16 %v446
    %v952 = vunpack.c.h.b16 %v446
    %v953 = vunpack.c.l.b16 %v447
    %v954 = vunpack.c.l.b16 %v448
    %v955 = vunpack.c.h.b16 %v448
    %v956 = vunpack.c.l.b16 %v449
    %v957 = vunpack.c.h.b16 %v449
    %v958 = vunpack.c.l.b16 %v450
    %v959 = vunpack.c.h.b16 %v450
    %v960 = vunpack.c.l.b16 %v451
    %v961 = vunpack.c.l.b16 %v452
    %v962 = vunpack.c.h.b16 %v452
    %v963 = vunpack.c.l.b16 %v453
    %v964 = vunpack.c.h.b16 %v453
    %v965 = vunpack.c.l.b16 %v454
    %v966 = vunpack.c.h.b16 %v454
    %v967 = vunpack.c.l.b16 %v455
    %v968 = vunpack.c.l.b16 %v456
    %v969 = vunpack.c.h.b16 %v456
    %v970 = vunpack.c.l.b16 %v457
    %v971 = vunpack.c.h.b16 %v457
    %v972 = vunpack.c.l.b16 %v458
    %v973 = vunpack.c.h.b16 %v458
    %v974 = vunpack.c.l.b16 %v459
    %v975 = vunpack.c.l.b16 %v460
    %v976 = vunpack.c.h.b16 %v460
    %v977 = vunpack.c.l.b16 %v461
    %v978 = vunpack.c.h.b16 %v461
    %v979 = vunpack.c.l.b16 %v462
    %v980 = vunpack.c.h.b16 %v462
    %v981 = vunpack.c.l.b16 %v463
    %v982 = vunpack.c.l.b16 %v464
    %v983 = vunpack.c.h.b16 %v464
    %v984 = vunpack.c.l.b16 %v465
    %v985 = vunpack.c.h.b16 %v465
    %v986 = vunpack.c.l.b16 %v466
    %v987 = vunpack.c.h.b16 %v466
    %v988 = vunpack.c.l.b16 %v467
    %v989 = vunpack.c.l.b16 %v468
    %v990 = vunpack.c.h.b16 %v468
    %v991 = vunpack.c.l.b16 %v469
    %v992 = vunpack.c.h.b16 %v469
    %v993 = vunpack.c.l.b16 %v470
    %v994 = vunpack.c.h.b16 %v470
    %v995 = vunpack.c.l.b16 %v471
    %v996 = vunpack.c.l.b16 %v472
    %v997 = vunpack.c.h.b16 %v472
    %v998 = vunpack.c.l.b16 %v473
    %v999 = vunpack.c.h.b16 %v473
    %v1000 = vunpack.c.l.b16 %v474
    %v1001 = vunpack.c.h.b16 %v474
    %v1002 = vunpack.c.l.b16 %v475
    %v1003 = vunpack.c.l.b16 %v476
    %v1004 = vunpack.c.h.b16 %v476
    %v1005 = vunpack.c.l.b16 %v477
    %v1006 = vunpack.c.h.b16 %v477
    %v1007 = vunpack.c.l.b16 %v478
    %v1008 = vunpack.c.h.b16 %v478
    %v1009 = vunpack.c.l.b16 %v479
    %v1010 = vunpack.c.l.b16 %v480
    %v1011 = vunpack.c.h.b16 %v480
    %v1012 = vunpack.c.l.b16 %v481
    %v1013 = vunpack.c.h.b16 %v481
    %v1014 = vunpack.c.l.b16 %v482
    %v1015 = vunpack.c.h.b16 %v482
    %v1016 = vunpack.c.l.b16 %v483
    %v1017 = vunpack.c.l.b16 %v484
    %v1018 = vunpack.c.h.b16 %v484
    %v1019 = vunpack.c.l.b16 %v485
    %v1020 = vunpack.c.h.b16 %v485
    %v1021 = vunpack.c.l.b16 %v486
    %v1022 = vunpack.c.h.b16 %v486
    %v1023 = vunpack.c.l.b16 %v487
    %v1024 = vunpack.c.l.b16 %v488
    %v1025 = vunpack.c.h.b16 %v488
    %v1026 = vunpack.c.l.b16 %v489
    %v1027 = vunpack.c.h.b16 %v489
    %v1028 = vunpack.c.l.b16 %v490
    %v1029 = vunpack.c.h.b16 %v490
    %v1030 = vunpack.c.l.b16 %v491
    %v1031 = vunpack.c.l.b16 %v492
    %v1032 = vunpack.c.h.b16 %v492
    %v1033 = vunpack.c.l.b16 %v493
    %v1034 = vunpack.c.h.b16 %v493
    %v1035 = vunpack.c.l.b16 %v494
    %v1036 = vunpack.c.h.b16 %v494
    %v1037 = vunpack.c.l.b16 %v495
    %v1038 = vunpack.c.l.b16 %v496
    %v1039 = vunpack.c.h.b16 %v496
    %v1040 = vunpack.c.l.b16 %v497
    %v1041 = vunpack.c.h.b16 %v497
    %v1042 = vunpack.c.l.b16 %v498
    %v1043 = vunpack.c.h.b16 %v498
    %v1044 = vunpack.c.l.b16 %v499
    %v1045 = vunpack.c.l.b16 %v500
    %v1046 = vunpack.c.h.b16 %v500
    %v1047 = vunpack.c.l.b16 %v501
    %v1048 = vunpack.c.h.b16 %v501
    %v1049 = vunpack.c.l.b16 %v502
    %v1050 = vunpack.c.h.b16 %v502
    %v1051 = vunpack.c.l.b16 %v503
    %v1052 = vunpack.c.l.b16 %v504
    %v1053 = vunpack.c.h.b16 %v504
    %v1054 = vunpack.c.l.b16 %v505
    %v1055 = vunpack.c.h.b16 %v505
    %v1056 = vunpack.c.l.b16 %v506
    %v1057 = vunpack.c.h.b16 %v506
    %v1058 = vunpack.c.l.b16 %v507
    %v1059 = vunpack.c.l.b16 %v508
    %v1060 = vunpack.c.h.b16 %v508
    %v1061 = vunpack.c.l.b16 %v509
    %v1062 = vunpack.c.h.b16 %v509
    %v1063 = vunpack.c.l.b16 %v510
    %v1064 = vunpack.c.h.b16 %v510
    %v1065 = vunpack.c.l.b16 %v511
    %v1066 = vunpack.c.l.b16 %v512
    %v1067 = vunpack.c.h.b16 %v512
    %v1068 = vunpack.c.l.b16 %v513
    %v1069 = vunpack.c.h.b16 %v513
    %v1070 = vunpack.c.l.b16 %v514
    %v1071 = vunpack.c.h.b16 %v514
    %v1072 = vunpack.c.l.b16 %v515
    %v1073 = vunpack.c.l.b16 %v516
    %v1074 = vunpack.c.h.b16 %v516
    %v1075 = vunpack.c.l.b16 %v517
    %v1076 = vunpack.c.h.b16 %v517
    %v1077 = vunpack.c.l.b16 %v518
    %v1078 = vunpack.c.h.b16 %v518
    %v1079 = vunpack.c.l.b16 %v519
    %v1080 = vunpack.c.l.b16 %v520
    %v1081 = vunpack.c.h.b16 %v520
    %v1082 = vunpack.c.l.b16 %v521
    %v1083 = vunpack.c.h.b16 %v521
    %v1084 = vunpack.c.l.b16 %v522
    %v1085 = vunpack.c.h.b16 %v522
    %v1086 = vunpack.c.l.b16 %v523
    %v1087 = vunpack.c.l.b16 %v524
    %v1088 = vunpack.c.h.b16 %v524
    %v1089 = vunpack.c.l.b16 %v525
    %v1090 = vunpack.c.h.b16 %v525
    %v1091 = vunpack.c.l.b16 %v526
    %v1092 = vunpack.c.h.b16 %v526
    %v1093 = vunpack.c.l.b16 %v527
    %v1094 = vunpack.c.l.b16 %v528
    %v1095 = vunpack.c.h.b16 %v528
    %v1096 = vunpack.c.l.b16 %v529
    %v1097 = vunpack.c.h.b16 %v529
    %v1098 = vunpack.c.l.b16 %v530
    %v1099 = vunpack.c.h.b16 %v530
    %v1100 = vunpack.c.l.b16 %v531
    %v1101 = vunpack.c.l.b16 %v532
    %v1102 = vunpack.c.h.b16 %v532
    %v1103 = vunpack.c.l.b16 %v533
    %v1104 = vunpack.c.h.b16 %v533
    %v1105 = vunpack.c.l.b16 %v534
    %v1106 = vunpack.c.h.b16 %v534
    %v1107 = vunpack.c.l.b16 %v535
    %v1108 = vunpack.c.l.b16 %v536
    %v1109 = vunpack.c.h.b16 %v536
    %v1110 = vunpack.c.l.b16 %v537
    %v1111 = vunpack.c.h.b16 %v537
    %v1112 = vunpack.c.l.b16 %v538
    %v1113 = vunpack.c.h.b16 %v538
    %v1114 = vunpack.c.l.b16 %v539
    %v1115 = vunpack.c.l.b16 %v540
    %v1116 = vunpack.c.h.b16 %v540
    %v1117 = vunpack.c.l.b16 %v541
    %v1118 = vunpack.c.h.b16 %v541
    %v1119 = vunpack.c.l.b16 %v542
    %v1120 = vunpack.c.h.b16 %v542
    %v1121 = vunpack.c.l.b16 %v543
    %v1122 = vunpack.c.l.b16 %v544
    %v1123 = vunpack.c.h.b16 %v544
    %v1124 = vunpack.c.l.b16 %v545
    %v1125 = vunpack.c.h.b16 %v545
    %v1126 = vunpack.c.l.b16 %v546
    %v1127 = vunpack.c.h.b16 %v546
    %v1128 = vunpack.c.l.b16 %v547
    %v1129 = vunpack.c.l.b16 %v548
    %v1130 = vunpack.c.h.b16 %v548
    %v1131 = vunpack.c.l.b16 %v549
    %v1132 = vunpack.c.h.b16 %v549
    %v1133 = vunpack.c.l.b16 %v550
    %v1134 = vunpack.c.h.b16 %v550
    %v1135 = vunpack.c.l.b16 %v551
    %v1136 = vunpack.c.l.b16 %v552
    %v1137 = vunpack.c.h.b16 %v552
    %v1138 = vunpack.c.l.b16 %v553
    %v1139 = vunpack.c.h.b16 %v553
    %v1140 = vunpack.c.l.b16 %v554
    %v1141 = vunpack.c.h.b16 %v554
    %v1142 = vunpack.c.l.b16 %v555
    %v1143 = vpack.c.b16 %v800, %v793
    %v1144 = vpack.c.b16 %v801, %v794
    %v1145 = vpack.c.b16 %v802, %v795
    %v1146 = vpack.c.b16 %v803, %v796
    %v1147 = vpack.c.b16 %v804, %v797
    %v1148 = vpack.c.b16 %v805, %v798
    %v1149 = vpack.c.b16 %v806, %v799
    %v1150 = vpack.c.b16 %v814, %v807
    %v1151 = vpack.c.b16 %v815, %v808
    %v1152 = vpack.c.b16 %v816, %v809
    %v1153 = vpack.c.b16 %v817, %v810
    %v1154 = vpack.c.b16 %v818, %v811
    %v1155 = vpack.c.b16 %v819, %v812
    %v1156 = vpack.c.b16 %v820, %v813
    %v1157 = vpack.c.b16 %v828, %v821
    %v1158 = vpack.c.b16 %v829, %v822
    %v1159 = vpack.c.b16 %v830, %v823
    %v1160 = vpack.c.b16 %v831, %v824
    %v1161 = vpack.c.b16 %v832, %v825
    %v1162 = vpack.c.b16 %v833, %v826
    %v1163 = vpack.c.b16 %v834, %v827
    %v1164 = vpack.c.b16 %v842, %v835
    %v1165 = vpack.c.b16 %v843, %v836
    %v1166 = vpack.c.b16 %v844, %v837
    %v1167 = vpack.c.b16 %v845, %v838
    %v1168 = vpack.c.b16 %v846, %v839
    %v1169 = vpack.c.b16 %v847, %v840
    %v1170 = vpack.c.b16 %v848, %v841
    %v1171 = vpack.c.b16 %v856, %v849
    %v1172 = vpack.c.b16 %v857, %v850
    %v1173 = vpack.c.b16 %v858, %v851
    %v1174 = vpack.c.b16 %v859, %v852
    %v1175 = vpack.c.b16 %v860, %v853
    %v1176 = vpack.c.b16 %v861, %v854
    %v1177 = vpack.c.b16 %v862, %v855
    %v1178 = vpack.c.b16 %v870, %v863
    %v1179 = vpack.c.b16 %v871, %v864
    %v1180 = vpack.c.b16 %v872, %v865
    %v1181 = vpack.c.b16 %v873, %v866
    %v1182 = vpack.c.b16 %v874, %v867
    %v1183 = vpack.c.b16 %v875, %v868
    %v1184 = vpack.c.b16 %v876, %v869
    %v1185 = vpack.c.b16 %v884, %v877
    %v1186 = vpack.c.b16 %v885, %v878
    %v1187 = vpack.c.b16 %v886, %v879
    %v1188 = vpack.c.b16 %v887, %v880
    %v1189 = vpack.c.b16 %v888, %v881
    %v1190 = vpack.c.b16 %v889, %v882
    %v1191 = vpack.c.b16 %v890, %v883
    %v1192 = vpack.c.b16 %v898, %v891
    %v1193 = vpack.c.b16 %v899, %v892
    %v1194 = vpack.c.b16 %v900, %v893
    %v1195 = vpack.c.b16 %v901, %v894
    %v1196 = vpack.c.b16 %v902, %v895
    %v1197 = vpack.c.b16 %v903, %v896
    %v1198 = vpack.c.b16 %v904, %v897
    %v1199 = vpack.c.b16 %v912, %v905
    %v1200 = vpack.c.b16 %v913, %v906
    %v1201 = vpack.c.b16 %v914, %v907
    %v1202 = vpack.c.b16 %v915, %v908
    %v1203 = vpack.c.b16 %v916, %v909
    %v1204 = vpack.c.b16 %v917, %v910
    %v1205 = vpack.c.b16 %v918, %v911
    %v1206 = vpack.c.b16 %v926, %v919
    %v1207 = vpack.c.b16 %v927, %v920
    %v1208 = vpack.c.b16 %v928, %v921
    %v1209 = vpack.c.b16 %v929, %v922
    %v1210 = vpack.c.b16 %v930, %v923
    %v1211 = vpack.c.b16 %v931, %v924
    %v1212 = vpack.c.b16 %v932, %v925
    %v1213 = vpack.c.b16 %v940, %v933
    %v1214 = vpack.c.b16 %v941, %v934
    %v1215 = vpack.c.b16 %v942, %v935
    %v1216 = vpack.c.b16 %v943, %v936
    %v1217 = vpack.c.b16 %v944, %v937
    %v1218 = vpack.c.b16 %v945, %v938
    %v1219 = vpack.c.b16 %v946, %v939
    %v1220 = vpack.c.b16 %v954, %v947
    %v1221 = vpack.c.b16 %v955, %v948
    %v1222 = vpack.c.b16 %v956, %v949
    %v1223 = vpack.c.b16 %v957, %v950
    %v1224 = vpack.c.b16 %v958, %v951
    %v1225 = vpack.c.b16 %v959, %v952
    %v1226 = vpack.c.b16 %v960, %v953
    %v1227 = vpack.c.b16 %v968, %v961
    %v1228 = vpack.c.b16 %v969, %v962
    %v1229 = vpack.c.b16 %v970, %v963
    %v1230 = vpack.c.b16 %v971, %v964
    %v1231 = vpack.c.b16 %v972, %v965
    %v1232 = vpack.c.b16 %v973, %v966
    %v1233 = vpack.c.b16 %v974, %v967
    %v1234 = vpack.c.b16 %v982, %v975
    %v1235 = vpack.c.b16 %v983, %v976
    %v1236 = vpack.c.b16 %v984, %v977
    %v1237 = vpack.c.b16 %v985, %v978
    %v1238 = vpack.c.b16 %v986, %v979
    %v1239 = vpack.c.b16 %v987, %v980
    %v1240 = vpack.c.b16 %v988, %v981
    %v1241 = vpack.c.b16 %v996, %v989
    %v1242 = vpack.c.b16 %v997, %v990
    %v1243 = vpack.c.b16 %v998, %v991
    %v1244 = vpack.c.b16 %v999, %v992
    %v1245 = vpack.c.b16 %v1000, %v993
    %v1246 = vpack.c.b16 %v1001, %v994
    %v1247 = vpack.c.b16 %v1002, %v995
    %v1248 = vpack.c.b16 %v1010, %v1003
    %v1249 = vpack.c.b16 %v1011, %v1004
    %v1250 = vpack.c.b16 %v1012, %v1005
    %v1251 = vpack.c.b16 %v1013, %v1006
    %v1252 = vpack.c.b16 %v1014, %v1007
    %v1253 = vpack.c.b16 %v1015, %v1008
    %v1254 = vpack.c.b16 %v1016, %v1009
    %v1255 = vpack.c.b16 %v1024, %v1017
    %v1256 = vpack.c.b16 %v1025, %v1018
    %v1257 = vpack.c.b16 %v1026, %v1019
    %v1258 = vpack.c.b16 %v1027, %v1020
    %v1259 = vpack.c.b16 %v1028, %v1021
    %v1260 = vpack.c.b16 %v1029, %v1022
    %v1261 = vpack.c.b16 %v1030, %v1023
    %v1262 = vpack.c.b16 %v1038, %v1031
    %v1263 = vpack.c.b16 %v1039, %v1032
    %v1264 = vpack.c.b16 %v1040, %v1033
    %v1265 = vpack.c.b16 %v1041, %v1034
    %v1266 = vpack.c.b16 %v1042, %v1035
    %v1267 = vpack.c.b16 %v1043, %v1036
    %v1268 = vpack.c.b16 %v1044, %v1037
    %v1269 = vpack.c.b16 %v1052, %v1045
    %v1270 = vpack.c.b16 %v1053, %v1046
    %v1271 = vpack.c.b16 %v1054, %v1047
    %v1272 = vpack.c.b16 %v1055, %v1048
    %v1273 = vpack.c.b16 %v1056, %v1049
    %v1274 = vpack.c.b16 %v1057, %v1050
    %v1275 = vpack.c.b16 %v1058, %v1051
    %v1276 = vpack.c.b16 %v1066, %v1059
    %v1277 = vpack.c.b16 %v1067, %v1060
    %v1278 = vpack.c.b16 %v1068, %v1061
    %v1279 = vpack.c.b16 %v1069, %v1062
    %v1280 = vpack.c.b16 %v1070, %v1063
    %v1281 = vpack.c.b16 %v1071, %v1064
    %v1282 = vpack.c.b16 %v1072, %v1065
    %v1283 = vpack.c.b16 %v1080, %v1073
    %v1284 = vpack.c.b16 %v1081, %v1074
    %v1285 = vpack.c.b16 %v1082, %v1075
    %v1286 = vpack.c.b16 %v1083, %v1076
    %v1287 = vpack.c.b16 %v1084, %v1077
    %v1288 = vpack.c.b16 %v1085, %v1078
    %v1289 = vpack.c.b16 %v1086, %v1079
    %v1290 = vpack.c.b16 %v1094, %v1087
    %v1291 = vpack.c.b16 %v1095, %v1088
    %v1292 = vpack.c.b16 %v1096, %v1089
    %v1293 = vpack.c.b16 %v1097, %v1090
    %v1294 = vpack.c.b16 %v1098, %v1091
    %v1295 = vpack.c.b16 %v1099, %v1092
    %v1296 = vpack.c.b16 %v1100, %v1093
    %v1297 = vpack.c.b16 %v1108, %v1101
    %v1298 = vpack.c.b16 %v1109, %v1102
    %v1299 = vpack.c.b16 %v1110, %v1103
    %v1300 = vpack.c.b16 %v1111, %v1104
    %v1301 = vpack.c.b16 %v1112, %v1105
    %v1302 = vpack.c.b16 %v1113, %v1106
    %v1303 = vpack.c.b16 %v1114, %v1107
    %v1304 = vpack.c.b16 %v1122, %v1115
    %v1305 = vpack.c.b16 %v1123, %v1116
    %v1306 = vpack.c.b16 %v1124, %v1117
    %v1307 = vpack.c.b16 %v1125, %v1118
    %v1308 = vpack.c.b16 %v1126, %v1119
    %v1309 = vpack.c.b16 %v1127, %v1120
    %v1310 = vpack.c.b16 %v1128, %v1121
    %v1311 = vpack.c.b16 %v1136, %v1129
    %v1312 = vpack.c.b16 %v1137, %v1130
    %v1313 = vpack.c.b16 %v1138, %v1131
    %v1314 = vpack.c.b16 %v1139, %v1132
    %v1315 = vpack.c.b16 %v1140, %v1133
    %v1316 = vpack.c.b16 %v1141, %v1134
    %v1317 = vpack.c.b16 %v1142, %v1135
    %vm1493 = vcmask 130048
    %v1495 = vsel %vm1493, %v343, 0
    %v1498 = vsel %vm1493, %v347, 0
    %v1501 = vsel %vm1493, %v351, 0
    %v1504 = vsel %vm1493, %v355, 0
    %1506 = vmatprep.subr.bf16.mxu0 %v1193
    %1507 = vmatpush1.bf16.msra.mxu0 %v1192
    %1508 = vmatprep.subr.bf16.mxu0 %v1186
    %1509 = vmatpush1.bf16.msra.mxu0 %v1185
    %1510 = vmatprep.subr.bf16.mxu0 %v1179
    %1511 = vmatpush1.bf16.msra.mxu0 %v1178
    %1512 = vmatprep.subr.bf16.mxu0 %v1172
    %1513 = vmatpush1.bf16.msra.mxu0 %v1171
    %1514 = vmatprep.subr.bf16.mxu0 %v1165
    %1515 = vmatpush1.bf16.msra.mxu0 %v1164
    %1516 = vmatprep.subr.bf16.mxu0 %v1158
    %1517 = vmatpush1.bf16.msra.mxu0 %v1157
    %1518 = vmatprep.subr.bf16.mxu0 %v1151
    %1519 = vmatpush1.bf16.msra.mxu0 %v1150
    %1520 = vmatprep.subr.bf16.mxu0 %v1144
    %1521 = vmatpush1.bf16.msra.mxu0 %v1143
    %1522 = vmatprep.subr.bf16.mxu0 %v1249
    %1523 = vmatpush2.bf16.msra.mxu0 %v1248
    %1524 = vmatprep.subr.bf16.mxu0 %v1242
    %1525 = vmatpush2.bf16.msra.mxu0 %v1241
    %1526 = vmatprep.subr.bf16.mxu0 %v1235
    %1527 = vmatpush2.bf16.msra.mxu0 %v1234
    %1528 = vmatprep.subr.bf16.mxu0 %v1228
    %1529 = vmatpush2.bf16.msra.mxu0 %v1227
    %1530 = vmatprep.subr.bf16.mxu0 %v1221
    %1531 = vmatpush2.bf16.msra.mxu0 %v1220
    %1532 = vmatprep.subr.bf16.mxu0 %v1214
    %1533 = vmatpush2.bf16.msra.mxu0 %v1213
    %1534 = vmatprep.subr.bf16.mxu0 %v1207
    %1535 = vmatpush2.bf16.msra.mxu0 %v1206
    %1536 = vmatprep.subr.bf16.mxu0 %v1200
    %1537 = vmatpush2.bf16.msra.mxu0 %v1199
    %1538 = vmatprep.mubr.bf16.mxu0 %v341
    %1539 = vmatmul.mubr.bf16.gmra.mxu0 %v340
    %v1540 = vpop.f32.mrf.mxu0
    %v1541 = vadd.f32 %v561, %v1540
    %v1542 = vpop.f32.mrf.mxu0
    %v1543 = vadd.f32 %v565, %v1542
    %v1544 = vpop.f32.mrf.mxu0
    %v1545 = vadd.f32 %v561, %v1544
    %v1546 = vpop.f32.mrf.mxu0
    %v1547 = vadd.f32 %v565, %v1546
    %1548 = vmatprep.mubr.bf16.mxu0 %v345
    %1549 = vmatmul.mubr.bf16.gmra.mxu0 %v344
    %v1550 = vpop.f32.mrf.mxu0
    %v1551 = vadd.f32 %v561, %v1550
    %v1552 = vpop.f32.mrf.mxu0
    %v1553 = vadd.f32 %v565, %v1552
    %v1554 = vpop.f32.mrf.mxu0
    %v1555 = vadd.f32 %v561, %v1554
    %v1556 = vpop.f32.mrf.mxu0
    %v1557 = vadd.f32 %v565, %v1556
    %1558 = vmatprep.mubr.bf16.mxu0 %v349
    %1559 = vmatmul.mubr.bf16.gmra.mxu0 %v348
    %v1560 = vpop.f32.mrf.mxu0
    %v1561 = vadd.f32 %v561, %v1560
    %v1562 = vpop.f32.mrf.mxu0
    %v1563 = vadd.f32 %v565, %v1562
    %v1564 = vpop.f32.mrf.mxu0
    %v1565 = vadd.f32 %v561, %v1564
    %v1566 = vpop.f32.mrf.mxu0
    %v1567 = vadd.f32 %v565, %v1566
    %1568 = vmatprep.mubr.bf16.mxu0 %v353
    %1569 = vmatmul.mubr.bf16.gmra.mxu0 %v352
    %v1570 = vpop.f32.mrf.mxu0
    %v1571 = vadd.f32 %v561, %v1570
    %v1572 = vpop.f32.mrf.mxu0
    %v1573 = vadd.f32 %v565, %v1572
    %v1574 = vpop.f32.mrf.mxu0
    %v1575 = vadd.f32 %v561, %v1574
    %v1576 = vpop.f32.mrf.mxu0
    %v1577 = vadd.f32 %v565, %v1576
    %1578 = vdwg.mxu0
    %1579 = vmatprep.subr.bf16.mxu0 %v1305
    %1580 = vmatpush1.bf16.msra.mxu0 %v1304
    %1581 = vmatprep.subr.bf16.mxu0 %v1298
    %1582 = vmatpush1.bf16.msra.mxu0 %v1297
    %1583 = vmatprep.subr.bf16.mxu0 %v1291
    %1584 = vmatpush1.bf16.msra.mxu0 %v1290
    %1585 = vmatprep.subr.bf16.mxu0 %v1284
    %1586 = vmatpush1.bf16.msra.mxu0 %v1283
    %1587 = vmatprep.subr.bf16.mxu0 %v1277
    %1588 = vmatpush1.bf16.msra.mxu0 %v1276
    %1589 = vmatprep.subr.bf16.mxu0 %v1270
    %1590 = vmatpush1.bf16.msra.mxu0 %v1269
    %1591 = vmatprep.subr.bf16.mxu0 %v1263
    %1592 = vmatpush1.bf16.msra.mxu0 %v1262
    %1593 = vmatprep.subr.bf16.mxu0 %v1256
    %1594 = vmatpush1.bf16.msra.mxu0 %v1255
    %1595 = vmatprep.subr.bf16.mxu0 0
    %1596 = vmatpush2.bf16.msra.mxu0 0
    %1597 = vmatprep.subr.bf16.mxu0 0
    %1598 = vmatpush2.bf16.msra.mxu0 0
    %1599 = vmatprep.subr.bf16.mxu0 0
    %1600 = vmatpush2.bf16.msra.mxu0 0
    %1601 = vmatprep.subr.bf16.mxu0 0
    %1602 = vmatpush2.bf16.msra.mxu0 0
    %1603 = vmatprep.subr.bf16.mxu0 0
    %1604 = vmatpush2.bf16.msra.mxu0 0
    %1605 = vmatprep.subr.bf16.mxu0 0
    %1606 = vmatpush2.bf16.msra.mxu0 0
    %1607 = vmatprep.subr.bf16.mxu0 0
    %1608 = vmatpush2.bf16.msra.mxu0 0
    %1609 = vmatprep.subr.bf16.mxu0 %v1312
    %1610 = vmatpush2.bf16.msra.mxu0 %v1311
    %1611 = vmatprep.mubr.bf16.mxu0 %v1495
    %1612 = vmatmul.mubr.bf16.gmra.mxu0 %v342
    %v1613 = vpop.f32.mrf.mxu0
    %v1614 = vadd.f32 %v1541, %v1613
    %v1615 = vpop.f32.mrf.mxu0
    %v1616 = vadd.f32 %v1543, %v1615
    %v1617 = vpop.f32.mrf.mxu0
    %v1618 = vadd.f32 %v1545, %v1617
    %v1619 = vpop.f32.mrf.mxu0
    %v1620 = vadd.f32 %v1547, %v1619
    %1621 = vmatprep.mubr.bf16.mxu0 %v1498
    %1622 = vmatmul.mubr.bf16.gmra.mxu0 %v346
    %v1623 = vpop.f32.mrf.mxu0
    %v1624 = vadd.f32 %v1551, %v1623
    %v1625 = vpop.f32.mrf.mxu0
    %v1626 = vadd.f32 %v1553, %v1625
    %v1627 = vpop.f32.mrf.mxu0
    %v1628 = vadd.f32 %v1555, %v1627
    %v1629 = vpop.f32.mrf.mxu0
    %v1630 = vadd.f32 %v1557, %v1629
    %1631 = vmatprep.mubr.bf16.mxu0 %v1501
    %1632 = vmatmul.mubr.bf16.gmra.mxu0 %v350
    %v1633 = vpop.f32.mrf.mxu0
    %v1634 = vadd.f32 %v1561, %v1633
    %v1635 = vpop.f32.mrf.mxu0
    %v1636 = vadd.f32 %v1563, %v1635
    %v1637 = vpop.f32.mrf.mxu0
    %v1638 = vadd.f32 %v1565, %v1637
    %v1639 = vpop.f32.mrf.mxu0
    %v1640 = vadd.f32 %v1567, %v1639
    %1641 = vmatprep.mubr.bf16.mxu0 %v1504
    %1642 = vmatmul.mubr.bf16.gmra.mxu0 %v354
    %v1643 = vpop.f32.mrf.mxu0
    %v1644 = vadd.f32 %v1571, %v1643
    %v1645 = vpop.f32.mrf.mxu0
    %v1646 = vadd.f32 %v1573, %v1645
    %v1647 = vpop.f32.mrf.mxu0
    %v1648 = vadd.f32 %v1575, %v1647
    %v1649 = vpop.f32.mrf.mxu0
    %v1650 = vadd.f32 %v1577, %v1649
    %1651 = vdwg.mxu0
    %1652 = vmatprep.subr.bf16.mxu0 %v1195
    %1653 = vmatpush1.bf16.msra.mxu0 %v1194
    %1654 = vmatprep.subr.bf16.mxu0 %v1188
    %1655 = vmatpush1.bf16.msra.mxu0 %v1187
    %1656 = vmatprep.subr.bf16.mxu0 %v1181
    %1657 = vmatpush1.bf16.msra.mxu0 %v1180
    %1658 = vmatprep.subr.bf16.mxu0 %v1174
    %1659 = vmatpush1.bf16.msra.mxu0 %v1173
    %1660 = vmatprep.subr.bf16.mxu0 %v1167
    %1661 = vmatpush1.bf16.msra.mxu0 %v1166
    %1662 = vmatprep.subr.bf16.mxu0 %v1160
    %1663 = vmatpush1.bf16.msra.mxu0 %v1159
    %1664 = vmatprep.subr.bf16.mxu0 %v1153
    %1665 = vmatpush1.bf16.msra.mxu0 %v1152
    %1666 = vmatprep.subr.bf16.mxu0 %v1146
    %1667 = vmatpush1.bf16.msra.mxu0 %v1145
    %1668 = vmatprep.subr.bf16.mxu0 %v1251
    %1669 = vmatpush2.bf16.msra.mxu0 %v1250
    %1670 = vmatprep.subr.bf16.mxu0 %v1244
    %1671 = vmatpush2.bf16.msra.mxu0 %v1243
    %1672 = vmatprep.subr.bf16.mxu0 %v1237
    %1673 = vmatpush2.bf16.msra.mxu0 %v1236
    %1674 = vmatprep.subr.bf16.mxu0 %v1230
    %1675 = vmatpush2.bf16.msra.mxu0 %v1229
    %1676 = vmatprep.subr.bf16.mxu0 %v1223
    %1677 = vmatpush2.bf16.msra.mxu0 %v1222
    %1678 = vmatprep.subr.bf16.mxu0 %v1216
    %1679 = vmatpush2.bf16.msra.mxu0 %v1215
    %1680 = vmatprep.subr.bf16.mxu0 %v1209
    %1681 = vmatpush2.bf16.msra.mxu0 %v1208
    %1682 = vmatprep.subr.bf16.mxu0 %v1202
    %1683 = vmatpush2.bf16.msra.mxu0 %v1201
    %1684 = vmatprep.mubr.bf16.mxu0 %v341
    %1685 = vmatmul.mubr.bf16.gmra.mxu0 %v340
    %v1686 = vpop.f32.mrf.mxu0
    %v1687 = vadd.f32 %v569, %v1686
    %v1688 = vpop.f32.mrf.mxu0
    %v1689 = vadd.f32 %v573, %v1688
    %v1690 = vpop.f32.mrf.mxu0
    %v1691 = vadd.f32 %v569, %v1690
    %v1692 = vpop.f32.mrf.mxu0
    %v1693 = vadd.f32 %v573, %v1692
    %1694 = vmatprep.mubr.bf16.mxu0 %v345
    %1695 = vmatmul.mubr.bf16.gmra.mxu0 %v344
    %v1696 = vpop.f32.mrf.mxu0
    %v1697 = vadd.f32 %v569, %v1696
    %v1698 = vpop.f32.mrf.mxu0
    %v1699 = vadd.f32 %v573, %v1698
    %v1700 = vpop.f32.mrf.mxu0
    %v1701 = vadd.f32 %v569, %v1700
    %v1702 = vpop.f32.mrf.mxu0
    %v1703 = vadd.f32 %v573, %v1702
    %1704 = vmatprep.mubr.bf16.mxu0 %v349
    %1705 = vmatmul.mubr.bf16.gmra.mxu0 %v348
    %v1706 = vpop.f32.mrf.mxu0
    %v1707 = vadd.f32 %v569, %v1706
    %v1708 = vpop.f32.mrf.mxu0
    %v1709 = vadd.f32 %v573, %v1708
    %v1710 = vpop.f32.mrf.mxu0
    %v1711 = vadd.f32 %v569, %v1710
    %v1712 = vpop.f32.mrf.mxu0
    %v1713 = vadd.f32 %v573, %v1712
    %1714 = vmatprep.mubr.bf16.mxu0 %v353
    %1715 = vmatmul.mubr.bf16.gmra.mxu0 %v352
    %v1716 = vpop.f32.mrf.mxu0
    %v1717 = vadd.f32 %v569, %v1716
    %v1718 = vpop.f32.mrf.mxu0
    %v1719 = vadd.f32 %v573, %v1718
    %v1720 = vpop.f32.mrf.mxu0
    %v1721 = vadd.f32 %v569, %v1720
    %v1722 = vpop.f32.mrf.mxu0
    %v1723 = vadd.f32 %v573, %v1722
    %1724 = vdwg.mxu0
    %1725 = vmatprep.subr.bf16.mxu0 %v1307
    %1726 = vmatpush1.bf16.msra.mxu0 %v1306
    %1727 = vmatprep.subr.bf16.mxu0 %v1300
    %1728 = vmatpush1.bf16.msra.mxu0 %v1299
    %1729 = vmatprep.subr.bf16.mxu0 %v1293
    %1730 = vmatpush1.bf16.msra.mxu0 %v1292
    %1731 = vmatprep.subr.bf16.mxu0 %v1286
    %1732 = vmatpush1.bf16.msra.mxu0 %v1285
    %1733 = vmatprep.subr.bf16.mxu0 %v1279
    %1734 = vmatpush1.bf16.msra.mxu0 %v1278
    %1735 = vmatprep.subr.bf16.mxu0 %v1272
    %1736 = vmatpush1.bf16.msra.mxu0 %v1271
    %1737 = vmatprep.subr.bf16.mxu0 %v1265
    %1738 = vmatpush1.bf16.msra.mxu0 %v1264
    %1739 = vmatprep.subr.bf16.mxu0 %v1258
    %1740 = vmatpush1.bf16.msra.mxu0 %v1257
    %1741 = vmatprep.subr.bf16.mxu0 0
    %1742 = vmatpush2.bf16.msra.mxu0 0
    %1743 = vmatprep.subr.bf16.mxu0 0
    %1744 = vmatpush2.bf16.msra.mxu0 0
    %1745 = vmatprep.subr.bf16.mxu0 0
    %1746 = vmatpush2.bf16.msra.mxu0 0
    %1747 = vmatprep.subr.bf16.mxu0 0
    %1748 = vmatpush2.bf16.msra.mxu0 0
    %1749 = vmatprep.subr.bf16.mxu0 0
    %1750 = vmatpush2.bf16.msra.mxu0 0
    %1751 = vmatprep.subr.bf16.mxu0 0
    %1752 = vmatpush2.bf16.msra.mxu0 0
    %1753 = vmatprep.subr.bf16.mxu0 0
    %1754 = vmatpush2.bf16.msra.mxu0 0
    %1755 = vmatprep.subr.bf16.mxu0 %v1314
    %1756 = vmatpush2.bf16.msra.mxu0 %v1313
    %1757 = vmatprep.mubr.bf16.mxu0 %v1495
    %1758 = vmatmul.mubr.bf16.gmra.mxu0 %v342
    %v1759 = vpop.f32.mrf.mxu0
    %v1760 = vadd.f32 %v1687, %v1759
    %v1761 = vpop.f32.mrf.mxu0
    %v1762 = vadd.f32 %v1689, %v1761
    %v1763 = vpop.f32.mrf.mxu0
    %v1764 = vadd.f32 %v1691, %v1763
    %v1765 = vpop.f32.mrf.mxu0
    %v1766 = vadd.f32 %v1693, %v1765
    %1767 = vmatprep.mubr.bf16.mxu0 %v1498
    %1768 = vmatmul.mubr.bf16.gmra.mxu0 %v346
    %v1769 = vpop.f32.mrf.mxu0
    %v1770 = vadd.f32 %v1697, %v1769
    %v1771 = vpop.f32.mrf.mxu0
    %v1772 = vadd.f32 %v1699, %v1771
    %v1773 = vpop.f32.mrf.mxu0
    %v1774 = vadd.f32 %v1701, %v1773
    %v1775 = vpop.f32.mrf.mxu0
    %v1776 = vadd.f32 %v1703, %v1775
    %1777 = vmatprep.mubr.bf16.mxu0 %v1501
    %1778 = vmatmul.mubr.bf16.gmra.mxu0 %v350
    %v1779 = vpop.f32.mrf.mxu0
    %v1780 = vadd.f32 %v1707, %v1779
    %v1781 = vpop.f32.mrf.mxu0
    %v1782 = vadd.f32 %v1709, %v1781
    %v1783 = vpop.f32.mrf.mxu0
    %v1784 = vadd.f32 %v1711, %v1783
    %v1785 = vpop.f32.mrf.mxu0
    %v1786 = vadd.f32 %v1713, %v1785
    %1787 = vmatprep.mubr.bf16.mxu0 %v1504
    %1788 = vmatmul.mubr.bf16.gmra.mxu0 %v354
    %v1789 = vpop.f32.mrf.mxu0
    %v1790 = vadd.f32 %v1717, %v1789
    %v1791 = vpop.f32.mrf.mxu0
    %v1792 = vadd.f32 %v1719, %v1791
    %v1793 = vpop.f32.mrf.mxu0
    %v1794 = vadd.f32 %v1721, %v1793
    %v1795 = vpop.f32.mrf.mxu0
    %v1796 = vadd.f32 %v1723, %v1795
    %1797 = vdwg.mxu0
    %1798 = vmatprep.subr.bf16.mxu0 %v1197
    %1799 = vmatpush1.bf16.msra.mxu0 %v1196
    %1800 = vmatprep.subr.bf16.mxu0 %v1190
    %1801 = vmatpush1.bf16.msra.mxu0 %v1189
    %1802 = vmatprep.subr.bf16.mxu0 %v1183
    %1803 = vmatpush1.bf16.msra.mxu0 %v1182
    %1804 = vmatprep.subr.bf16.mxu0 %v1176
    %1805 = vmatpush1.bf16.msra.mxu0 %v1175
    %1806 = vmatprep.subr.bf16.mxu0 %v1169
    %1807 = vmatpush1.bf16.msra.mxu0 %v1168
    %1808 = vmatprep.subr.bf16.mxu0 %v1162
    %1809 = vmatpush1.bf16.msra.mxu0 %v1161
    %1810 = vmatprep.subr.bf16.mxu0 %v1155
    %1811 = vmatpush1.bf16.msra.mxu0 %v1154
    %1812 = vmatprep.subr.bf16.mxu0 %v1148
    %1813 = vmatpush1.bf16.msra.mxu0 %v1147
    %1814 = vmatprep.subr.bf16.mxu0 %v1253
    %1815 = vmatpush2.bf16.msra.mxu0 %v1252
    %1816 = vmatprep.subr.bf16.mxu0 %v1246
    %1817 = vmatpush2.bf16.msra.mxu0 %v1245
    %1818 = vmatprep.subr.bf16.mxu0 %v1239
    %1819 = vmatpush2.bf16.msra.mxu0 %v1238
    %1820 = vmatprep.subr.bf16.mxu0 %v1232
    %1821 = vmatpush2.bf16.msra.mxu0 %v1231
    %1822 = vmatprep.subr.bf16.mxu0 %v1225
    %1823 = vmatpush2.bf16.msra.mxu0 %v1224
    %1824 = vmatprep.subr.bf16.mxu0 %v1218
    %1825 = vmatpush2.bf16.msra.mxu0 %v1217
    %1826 = vmatprep.subr.bf16.mxu0 %v1211
    %1827 = vmatpush2.bf16.msra.mxu0 %v1210
    %1828 = vmatprep.subr.bf16.mxu0 %v1204
    %1829 = vmatpush2.bf16.msra.mxu0 %v1203
    %1830 = vmatprep.mubr.bf16.mxu0 %v341
    %1831 = vmatmul.mubr.bf16.gmra.mxu0 %v340
    %v1832 = vpop.f32.mrf.mxu0
    %v1833 = vadd.f32 %v577, %v1832
    %v1834 = vpop.f32.mrf.mxu0
    %v1835 = vadd.f32 %v581, %v1834
    %v1836 = vpop.f32.mrf.mxu0
    %v1837 = vadd.f32 %v577, %v1836
    %v1838 = vpop.f32.mrf.mxu0
    %v1839 = vadd.f32 %v581, %v1838
    %1840 = vmatprep.mubr.bf16.mxu0 %v345
    %1841 = vmatmul.mubr.bf16.gmra.mxu0 %v344
    %v1842 = vpop.f32.mrf.mxu0
    %v1843 = vadd.f32 %v577, %v1842
    %v1844 = vpop.f32.mrf.mxu0
    %v1845 = vadd.f32 %v581, %v1844
    %v1846 = vpop.f32.mrf.mxu0
    %v1847 = vadd.f32 %v577, %v1846
    %v1848 = vpop.f32.mrf.mxu0
    %v1849 = vadd.f32 %v581, %v1848
    %1850 = vmatprep.mubr.bf16.mxu0 %v349
    %1851 = vmatmul.mubr.bf16.gmra.mxu0 %v348
    %v1852 = vpop.f32.mrf.mxu0
    %v1853 = vadd.f32 %v577, %v1852
    %v1854 = vpop.f32.mrf.mxu0
    %v1855 = vadd.f32 %v581, %v1854
    %v1856 = vpop.f32.mrf.mxu0
    %v1857 = vadd.f32 %v577, %v1856
    %v1858 = vpop.f32.mrf.mxu0
    %v1859 = vadd.f32 %v581, %v1858
    %1860 = vmatprep.mubr.bf16.mxu0 %v353
    %1861 = vmatmul.mubr.bf16.gmra.mxu0 %v352
    %v1862 = vpop.f32.mrf.mxu0
    %v1863 = vadd.f32 %v577, %v1862
    %v1864 = vpop.f32.mrf.mxu0
    %v1865 = vadd.f32 %v581, %v1864
    %v1866 = vpop.f32.mrf.mxu0
    %v1867 = vadd.f32 %v577, %v1866
    %v1868 = vpop.f32.mrf.mxu0
    %v1869 = vadd.f32 %v581, %v1868
    %1870 = vdwg.mxu0
    %1871 = vmatprep.subr.bf16.mxu0 %v1309
    %1872 = vmatpush1.bf16.msra.mxu0 %v1308
    %1873 = vmatprep.subr.bf16.mxu0 %v1302
    %1874 = vmatpush1.bf16.msra.mxu0 %v1301
    %1875 = vmatprep.subr.bf16.mxu0 %v1295
    %1876 = vmatpush1.bf16.msra.mxu0 %v1294
    %1877 = vmatprep.subr.bf16.mxu0 %v1288
    %1878 = vmatpush1.bf16.msra.mxu0 %v1287
    %1879 = vmatprep.subr.bf16.mxu0 %v1281
    %1880 = vmatpush1.bf16.msra.mxu0 %v1280
    %1881 = vmatprep.subr.bf16.mxu0 %v1274
    %1882 = vmatpush1.bf16.msra.mxu0 %v1273
    %1883 = vmatprep.subr.bf16.mxu0 %v1267
    %1884 = vmatpush1.bf16.msra.mxu0 %v1266
    %1885 = vmatprep.subr.bf16.mxu0 %v1260
    %1886 = vmatpush1.bf16.msra.mxu0 %v1259
    %1887 = vmatprep.subr.bf16.mxu0 0
    %1888 = vmatpush2.bf16.msra.mxu0 0
    %1889 = vmatprep.subr.bf16.mxu0 0
    %1890 = vmatpush2.bf16.msra.mxu0 0
    %1891 = vmatprep.subr.bf16.mxu0 0
    %1892 = vmatpush2.bf16.msra.mxu0 0
    %1893 = vmatprep.subr.bf16.mxu0 0
    %1894 = vmatpush2.bf16.msra.mxu0 0
    %1895 = vmatprep.subr.bf16.mxu0 0
    %1896 = vmatpush2.bf16.msra.mxu0 0
    %1897 = vmatprep.subr.bf16.mxu0 0
    %1898 = vmatpush2.bf16.msra.mxu0 0
    %1899 = vmatprep.subr.bf16.mxu0 0
    %1900 = vmatpush2.bf16.msra.mxu0 0
    %1901 = vmatprep.subr.bf16.mxu0 %v1316
    %1902 = vmatpush2.bf16.msra.mxu0 %v1315
    %1903 = vmatprep.mubr.bf16.mxu0 %v1495
    %1904 = vmatmul.mubr.bf16.gmra.mxu0 %v342
    %v1905 = vpop.f32.mrf.mxu0
    %v1906 = vadd.f32 %v1833, %v1905
    %v1907 = vpop.f32.mrf.mxu0
    %v1908 = vadd.f32 %v1835, %v1907
    %v1909 = vpop.f32.mrf.mxu0
    %v1910 = vadd.f32 %v1837, %v1909
    %v1911 = vpop.f32.mrf.mxu0
    %v1912 = vadd.f32 %v1839, %v1911
    %1913 = vmatprep.mubr.bf16.mxu0 %v1498
    %1914 = vmatmul.mubr.bf16.gmra.mxu0 %v346
    %v1915 = vpop.f32.mrf.mxu0
    %v1916 = vadd.f32 %v1843, %v1915
    %v1917 = vpop.f32.mrf.mxu0
    %v1918 = vadd.f32 %v1845, %v1917
    %v1919 = vpop.f32.mrf.mxu0
    %v1920 = vadd.f32 %v1847, %v1919
    %v1921 = vpop.f32.mrf.mxu0
    %v1922 = vadd.f32 %v1849, %v1921
    %1923 = vmatprep.mubr.bf16.mxu0 %v1501
    %1924 = vmatmul.mubr.bf16.gmra.mxu0 %v350
    %v1925 = vpop.f32.mrf.mxu0
    %v1926 = vadd.f32 %v1853, %v1925
    %v1927 = vpop.f32.mrf.mxu0
    %v1928 = vadd.f32 %v1855, %v1927
    %v1929 = vpop.f32.mrf.mxu0
    %v1930 = vadd.f32 %v1857, %v1929
    %v1931 = vpop.f32.mrf.mxu0
    %v1932 = vadd.f32 %v1859, %v1931
    %1933 = vmatprep.mubr.bf16.mxu0 %v1504
    %1934 = vmatmul.mubr.bf16.gmra.mxu0 %v354
    %v1935 = vpop.f32.mrf.mxu0
    %v1936 = vadd.f32 %v1863, %v1935
    %v1937 = vpop.f32.mrf.mxu0
    %v1938 = vadd.f32 %v1865, %v1937
    %v1939 = vpop.f32.mrf.mxu0
    %v1940 = vadd.f32 %v1867, %v1939
    %v1941 = vpop.f32.mrf.mxu0
    %v1942 = vadd.f32 %v1869, %v1941
    %1943 = vdwg.mxu0
    %1944 = vmatprep.subr.bf16.mxu0 0
    %1945 = vmatpush1.bf16.msra.mxu0 %v1198
    %1946 = vmatprep.subr.bf16.mxu0 0
    %1947 = vmatpush1.bf16.msra.mxu0 %v1191
    %1948 = vmatprep.subr.bf16.mxu0 0
    %1949 = vmatpush1.bf16.msra.mxu0 %v1184
    %1950 = vmatprep.subr.bf16.mxu0 0
    %1951 = vmatpush1.bf16.msra.mxu0 %v1177
    %1952 = vmatprep.subr.bf16.mxu0 0
    %1953 = vmatpush1.bf16.msra.mxu0 %v1170
    %1954 = vmatprep.subr.bf16.mxu0 0
    %1955 = vmatpush1.bf16.msra.mxu0 %v1163
    %1956 = vmatprep.subr.bf16.mxu0 0
    %1957 = vmatpush1.bf16.msra.mxu0 %v1156
    %1958 = vmatprep.subr.bf16.mxu0 0
    %1959 = vmatpush1.bf16.msra.mxu0 %v1149
    %1960 = vmatprep.subr.bf16.mxu0 0
    %1961 = vmatpush2.bf16.msra.mxu0 %v1254
    %1962 = vmatprep.subr.bf16.mxu0 0
    %1963 = vmatpush2.bf16.msra.mxu0 %v1247
    %1964 = vmatprep.subr.bf16.mxu0 0
    %1965 = vmatpush2.bf16.msra.mxu0 %v1240
    %1966 = vmatprep.subr.bf16.mxu0 0
    %1967 = vmatpush2.bf16.msra.mxu0 %v1233
    %1968 = vmatprep.subr.bf16.mxu0 0
    %1969 = vmatpush2.bf16.msra.mxu0 %v1226
    %1970 = vmatprep.subr.bf16.mxu0 0
    %1971 = vmatpush2.bf16.msra.mxu0 %v1219
    %1972 = vmatprep.subr.bf16.mxu0 0
    %1973 = vmatpush2.bf16.msra.mxu0 %v1212
    %1974 = vmatprep.subr.bf16.mxu0 0
    %1975 = vmatpush2.bf16.msra.mxu0 %v1205
    %1976 = vmatprep.mubr.bf16.mxu0 %v341
    %1977 = vmatmul.mubr.bf16.gmra.mxu0 %v340
    %v1978 = vpop.f32.mrf.mxu0
    %v1979 = vadd.f32 %v585, %v1978
    %v1980 = vpop.f32.mrf.mxu0
    %v1981 = vpop.f32.mrf.mxu0
    %v1982 = vadd.f32 %v585, %v1981
    %v1983 = vpop.f32.mrf.mxu0
    %1984 = vmatprep.mubr.bf16.mxu0 %v345
    %1985 = vmatmul.mubr.bf16.gmra.mxu0 %v344
    %v1986 = vpop.f32.mrf.mxu0
    %v1987 = vadd.f32 %v585, %v1986
    %v1988 = vpop.f32.mrf.mxu0
    %v1989 = vpop.f32.mrf.mxu0
    %v1990 = vadd.f32 %v585, %v1989
    %v1991 = vpop.f32.mrf.mxu0
    %1992 = vmatprep.mubr.bf16.mxu0 %v349
    %1993 = vmatmul.mubr.bf16.gmra.mxu0 %v348
    %v1994 = vpop.f32.mrf.mxu0
    %v1995 = vadd.f32 %v585, %v1994
    %v1996 = vpop.f32.mrf.mxu0
    %v1997 = vpop.f32.mrf.mxu0
    %v1998 = vadd.f32 %v585, %v1997
    %v1999 = vpop.f32.mrf.mxu0
    %2000 = vmatprep.mubr.bf16.mxu0 %v353
    %2001 = vmatmul.mubr.bf16.gmra.mxu0 %v352
    %v2002 = vpop.f32.mrf.mxu0
    %v2003 = vadd.f32 %v585, %v2002
    %v2004 = vpop.f32.mrf.mxu0
    %v2005 = vpop.f32.mrf.mxu0
    %v2006 = vadd.f32 %v585, %v2005
    %v2007 = vpop.f32.mrf.mxu0
    %2008 = vdwg.mxu0
    %2009 = vmatprep.subr.bf16.mxu0 0
    %2010 = vmatpush1.bf16.msra.mxu0 %v1310
    %2011 = vmatprep.subr.bf16.mxu0 0
    %2012 = vmatpush1.bf16.msra.mxu0 %v1303
    %2013 = vmatprep.subr.bf16.mxu0 0
    %2014 = vmatpush1.bf16.msra.mxu0 %v1296
    %2015 = vmatprep.subr.bf16.mxu0 0
    %2016 = vmatpush1.bf16.msra.mxu0 %v1289
    %2017 = vmatprep.subr.bf16.mxu0 0
    %2018 = vmatpush1.bf16.msra.mxu0 %v1282
    %2019 = vmatprep.subr.bf16.mxu0 0
    %2020 = vmatpush1.bf16.msra.mxu0 %v1275
    %2021 = vmatprep.subr.bf16.mxu0 0
    %2022 = vmatpush1.bf16.msra.mxu0 %v1268
    %2023 = vmatprep.subr.bf16.mxu0 0
    %2024 = vmatpush1.bf16.msra.mxu0 %v1261
    %2025 = vmatprep.subr.bf16.mxu0 0
    %2026 = vmatpush2.bf16.msra.mxu0 0
    %2027 = vmatprep.subr.bf16.mxu0 0
    %2028 = vmatpush2.bf16.msra.mxu0 0
    %2029 = vmatprep.subr.bf16.mxu0 0
    %2030 = vmatpush2.bf16.msra.mxu0 0
    %2031 = vmatprep.subr.bf16.mxu0 0
    %2032 = vmatpush2.bf16.msra.mxu0 0
    %2033 = vmatprep.subr.bf16.mxu0 0
    %2034 = vmatpush2.bf16.msra.mxu0 0
    %2035 = vmatprep.subr.bf16.mxu0 0
    %2036 = vmatpush2.bf16.msra.mxu0 0
    %2037 = vmatprep.subr.bf16.mxu0 0
    %2038 = vmatpush2.bf16.msra.mxu0 0
    %2039 = vmatprep.subr.bf16.mxu0 0
    %2040 = vmatpush2.bf16.msra.mxu0 %v1317
    %2041 = vmatprep.mubr.bf16.mxu0 %v1495
    %2042 = vmatmul.mubr.bf16.gmra.mxu0 %v342
    %v2043 = vpop.f32.mrf.mxu0
    %v2044 = vadd.f32 %v1979, %v2043
    %v2045 = vpop.f32.mrf.mxu0
    %v2046 = vpop.f32.mrf.mxu0
    %v2047 = vadd.f32 %v1982, %v2046
    %v2048 = vpop.f32.mrf.mxu0
    %2049 = vmatprep.mubr.bf16.mxu0 %v1498
    %2050 = vmatmul.mubr.bf16.gmra.mxu0 %v346
    %v2051 = vpop.f32.mrf.mxu0
    %v2052 = vadd.f32 %v1987, %v2051
    %v2053 = vpop.f32.mrf.mxu0
    %v2054 = vpop.f32.mrf.mxu0
    %v2055 = vadd.f32 %v1990, %v2054
    %v2056 = vpop.f32.mrf.mxu0
    %2057 = vmatprep.mubr.bf16.mxu0 %v1501
    %2058 = vmatmul.mubr.bf16.gmra.mxu0 %v350
    %v2059 = vpop.f32.mrf.mxu0
    %v2060 = vadd.f32 %v1995, %v2059
    %v2061 = vpop.f32.mrf.mxu0
    %v2062 = vpop.f32.mrf.mxu0
    %v2063 = vadd.f32 %v1998, %v2062
    %v2064 = vpop.f32.mrf.mxu0
    %2065 = vmatprep.mubr.bf16.mxu0 %v1504
    %2066 = vmatmul.mubr.bf16.gmra.mxu0 %v354
    %v2067 = vpop.f32.mrf.mxu0
    %v2068 = vadd.f32 %v2003, %v2067
    %v2069 = vpop.f32.mrf.mxu0
    %v2070 = vpop.f32.mrf.mxu0
    %v2071 = vadd.f32 %v2006, %v2070
    %v2072 = vpop.f32.mrf.mxu0
    %2073 = vdwg.mxu0
    %v2074 = vmax.f32 %v1614, 0.0
    %v2075 = vmax.f32 %v1616, 0.0
    %v2076 = vmax.f32 %v1760, 0.0
    %v2077 = vmax.f32 %v1762, 0.0
    %v2078 = vmax.f32 %v1906, 0.0
    %v2079 = vmax.f32 %v1908, 0.0
    %v2080 = vmax.f32 %v2044, 0.0
    %v2081 = vmax.f32 %v1618, 0.0
    %v2082 = vmax.f32 %v1620, 0.0
    %v2083 = vmax.f32 %v1764, 0.0
    %v2084 = vmax.f32 %v1766, 0.0
    %v2085 = vmax.f32 %v1910, 0.0
    %v2086 = vmax.f32 %v1912, 0.0
    %v2087 = vmax.f32 %v2047, 0.0
    %v2088 = vmax.f32 %v1624, 0.0
    %v2089 = vmax.f32 %v1626, 0.0
    %v2090 = vmax.f32 %v1770, 0.0
    %v2091 = vmax.f32 %v1772, 0.0
    %v2092 = vmax.f32 %v1916, 0.0
    %v2093 = vmax.f32 %v1918, 0.0
    %v2094 = vmax.f32 %v2052, 0.0
    %v2095 = vmax.f32 %v1628, 0.0
    %v2096 = vmax.f32 %v1630, 0.0
    %v2097 = vmax.f32 %v1774, 0.0
    %v2098 = vmax.f32 %v1776, 0.0
    %v2099 = vmax.f32 %v1920, 0.0
    %v2100 = vmax.f32 %v1922, 0.0
    %v2101 = vmax.f32 %v2055, 0.0
    %v2102 = vmax.f32 %v1634, 0.0
    %v2103 = vmax.f32 %v1636, 0.0
    %v2104 = vmax.f32 %v1780, 0.0
    %v2105 = vmax.f32 %v1782, 0.0
    %v2106 = vmax.f32 %v1926, 0.0
    %v2107 = vmax.f32 %v1928, 0.0
    %v2108 = vmax.f32 %v2060, 0.0
    %v2109 = vmax.f32 %v1638, 0.0
    %v2110 = vmax.f32 %v1640, 0.0
    %v2111 = vmax.f32 %v1784, 0.0
    %v2112 = vmax.f32 %v1786, 0.0
    %v2113 = vmax.f32 %v1930, 0.0
    %v2114 = vmax.f32 %v1932, 0.0
    %v2115 = vmax.f32 %v2063, 0.0
    %v2116 = vmax.f32 %v1644, 0.0
    %v2117 = vmax.f32 %v1646, 0.0
    %v2118 = vmax.f32 %v1790, 0.0
    %v2119 = vmax.f32 %v1792, 0.0
    %v2120 = vmax.f32 %v1936, 0.0
    %v2121 = vmax.f32 %v1938, 0.0
    %v2122 = vmax.f32 %v2068, 0.0
    %v2123 = vmax.f32 %v1648, 0.0
    %v2124 = vmax.f32 %v1650, 0.0
    %v2125 = vmax.f32 %v1794, 0.0
    %v2126 = vmax.f32 %v1796, 0.0
    %v2127 = vmax.f32 %v1940, 0.0
    %v2128 = vmax.f32 %v1942, 0.0
    %v2129 = vmax.f32 %v2071, 0.0
    %v2130 = vpack.c.bf16 %v2081, %v2074
    %v2131 = vpack.c.bf16 %v2082, %v2075
    %v2132 = vpack.c.bf16 %v2083, %v2076
    %v2133 = vpack.c.bf16 %v2084, %v2077
    %v2134 = vpack.c.bf16 %v2085, %v2078
    %v2135 = vpack.c.bf16 %v2086, %v2079
    %v2136 = vpack.c.bf16 %v2087, %v2080
    %v2137 = vpack.c.bf16 %v2095, %v2088
    %v2138 = vpack.c.bf16 %v2096, %v2089
    %v2139 = vpack.c.bf16 %v2097, %v2090
    %v2140 = vpack.c.bf16 %v2098, %v2091
    %v2141 = vpack.c.bf16 %v2099, %v2092
    %v2142 = vpack.c.bf16 %v2100, %v2093
    %v2143 = vpack.c.bf16 %v2101, %v2094
    %v2144 = vpack.c.bf16 %v2109, %v2102
    %v2145 = vpack.c.bf16 %v2110, %v2103
    %v2146 = vpack.c.bf16 %v2111, %v2104
    %v2147 = vpack.c.bf16 %v2112, %v2105
    %v2148 = vpack.c.bf16 %v2113, %v2106
    %v2149 = vpack.c.bf16 %v2114, %v2107
    %v2150 = vpack.c.bf16 %v2115, %v2108
    %v2151 = vpack.c.bf16 %v2123, %v2116
    %v2152 = vpack.c.bf16 %v2124, %v2117
    %v2153 = vpack.c.bf16 %v2125, %v2118
    %v2154 = vpack.c.bf16 %v2126, %v2119
    %v2155 = vpack.c.bf16 %v2127, %v2120
    %v2156 = vpack.c.bf16 %v2128, %v2121
    %v2157 = vpack.c.bf16 %v2129, %v2122
    %v2158 = vld [vmem:[#allocation4] sm:$0xf]
    %v2159 = vld [vmem:[#allocation4 + $0x4] sm:$0xf]
    %v2160 = vld [vmem:[#allocation4 + $0x8] sm:$0xf]
    %v2161 = vld [vmem:[#allocation4 + $0xc] sm:$0xf]
    %v2162 = vld [vmem:[#allocation4 + $0x10] sm:$0xf]
    %v2163 = vld [vmem:[#allocation4 + $0x14] sm:$0xf]
    %v2164 = vld [vmem:[#allocation4 + $0x18] sm:$0xf]
    %v2165 = vld [vmem:[#allocation4 + $0x1c] sm:$0xf]
    %v2166 = vld [vmem:[#allocation4 + $0x20] sm:$0xf]
    %v2167 = vld [vmem:[#allocation4 + $0x24] sm:$0xf]
    %v2168 = vld [vmem:[#allocation4 + $0x28] sm:$0xf]
    %v2169 = vld [vmem:[#allocation4 + $0x2c] sm:$0xf]
    %v2170 = vld [vmem:[#allocation4 + $0x30] sm:$0xf]
    %v2171 = vld [vmem:[#allocation4 + $0x34] sm:$0xf]
    %v2172 = vld [vmem:[#allocation4 + $0x38] sm:$0xf]
    %v2173 = vld [vmem:[#allocation4 + $0x3c] sm:$0xf]
    %v2174 = vld [vmem:[#allocation4 + $0x40] sm:$0xf]
    %v2175 = vld [vmem:[#allocation4 + $0x44] sm:$0xf]
    %v2176 = vld [vmem:[#allocation4 + $0x48] sm:$0xf]
    %v2177 = vld [vmem:[#allocation4 + $0x4c] sm:$0xf]
    %v2178 = vld [vmem:[#allocation4 + $0x50] sm:$0xf]
    %v2179 = vld [vmem:[#allocation4 + $0x54] sm:$0xf]
    %v2180 = vld [vmem:[#allocation4 + $0x58] sm:$0xf]
    %v2181 = vld [vmem:[#allocation4 + $0x5c] sm:$0xf]
    %v2182 = vld [vmem:[#allocation4 + $0x60] sm:$0xf]
    %v2183 = vld [vmem:[#allocation4 + $0x64] sm:$0xf]
    %v2184 = vld [vmem:[#allocation4 + $0x68] sm:$0xf]
    %v2185 = vld [vmem:[#allocation4 + $0x6c] sm:$0xf]
    %v2186 = vld [vmem:[#allocation4 + $0x70] sm:$0xf]
    %v2187 = vld [vmem:[#allocation4 + $0x74] sm:$0xf]
    %v2188 = vld [vmem:[#allocation4 + $0x78] sm:$0xf]
    %v2189 = vld [vmem:[#allocation4 + $0x7c] sm:$0xf]
    %v2190 = vld [vmem:[#allocation4 + $0x80] sm:$0xf]
    %v2191 = vld [vmem:[#allocation4 + $0x84] sm:$0xf]
    %v2192 = vld [vmem:[#allocation4 + $0x88] sm:$0xf]
    %v2193 = vld [vmem:[#allocation4 + $0x8c] sm:$0xf]
    %v2194 = vld [vmem:[#allocation4 + $0x90] sm:$0xf]
    %v2195 = vld [vmem:[#allocation4 + $0x94] sm:$0xf]
    %v2196 = vld [vmem:[#allocation4 + $0x98] sm:$0xf]
    %v2197 = vld [vmem:[#allocation4 + $0x9c] sm:$0xf]
    %v2198 = vld [vmem:[#allocation4 + $0xa0] sm:$0xf]
    %v2199 = vld [vmem:[#allocation4 + $0xa4] sm:$0xf]
    %v2200 = vld [vmem:[#allocation4 + $0xa8] sm:$0xf]
    %v2201 = vld [vmem:[#allocation4 + $0xac] sm:$0xf]
    %v2202 = vld [vmem:[#allocation4 + $0xb0] sm:$0xf]
    %v2203 = vld [vmem:[#allocation4 + $0xb4] sm:$0xf]
    %v2204 = vld [vmem:[#allocation4 + $0xb8] sm:$0xf]
    %v2205 = vld [vmem:[#allocation4 + $0xbc] sm:$0xf]
    %v2206 = vld [vmem:[#allocation4 + $0xc0] sm:$0xf]
    %v2207 = vld [vmem:[#allocation4 + $0xc4] sm:$0xf]
    %v2208 = vld [vmem:[#allocation4 + $0xc8] sm:$0xf]
    %v2209 = vld [vmem:[#allocation4 + $0xcc] sm:$0xf]
    %v2210 = vld [vmem:[#allocation4 + $0xd0] sm:$0xf]
    %v2211 = vld [vmem:[#allocation4 + $0xd4] sm:$0xf]
    %v2212 = vld [vmem:[#allocation4 + $0xd8] sm:$0xf]
    %v2213 = vld [vmem:[#allocation4 + $0xdc] sm:$0xf]
    %v2214 = vld [vmem:[#allocation4 + $0xe0] sm:$0xf]
    %v2215 = vld [vmem:[#allocation4 + $0xe4] sm:$0xf]
    %v2216 = vld [vmem:[#allocation4 + $0xe8] sm:$0xf]
    %v2217 = vld [vmem:[#allocation4 + $0xec] sm:$0xf]
    %v2218 = vld [vmem:[#allocation4 + $0xf0] sm:$0xf]
    %v2219 = vld [vmem:[#allocation4 + $0xf4] sm:$0xf]
    %v2220 = vld [vmem:[#allocation4 + $0xf8] sm:$0xf]
    %v2221 = vld [vmem:[#allocation4 + $0xfc] sm:$0xf]
    %v2222 = vld [vmem:[#allocation4 + $0x100] sm:$0xf]
    %v2223 = vld [vmem:[#allocation4 + $0x104] sm:$0xf]
    %v2224 = vld [vmem:[#allocation4 + $0x108] sm:$0xf]
    %v2225 = vld [vmem:[#allocation4 + $0x10c] sm:$0xf]
    %v2226 = vld [vmem:[#allocation4 + $0x110] sm:$0xf]
    %v2227 = vld [vmem:[#allocation4 + $0x114] sm:$0xf]
    %v2228 = vld [vmem:[#allocation4 + $0x118] sm:$0xf]
    %v2229 = vld [vmem:[#allocation4 + $0x11c] sm:$0xf]
    %v2230 = vld [vmem:[#allocation4 + $0x120] sm:$0xf]
    %v2231 = vld [vmem:[#allocation4 + $0x124] sm:$0xf]
    %v2232 = vld [vmem:[#allocation4 + $0x128] sm:$0xf]
    %v2233 = vld [vmem:[#allocation4 + $0x12c] sm:$0xf]
    %v2234 = vld [vmem:[#allocation4 + $0x130] sm:$0xf]
    %v2235 = vld [vmem:[#allocation4 + $0x134] sm:$0xf]
    %v2236 = vld [vmem:[#allocation4 + $0x138] sm:$0xf]
    %v2237 = vld [vmem:[#allocation4 + $0x13c] sm:$0xf]
    %v2238 = vld [vmem:[#allocation4 + $0x140] sm:$0xf]
    %v2239 = vld [vmem:[#allocation4 + $0x144] sm:$0xf]
    %v2240 = vld [vmem:[#allocation4 + $0x148] sm:$0xf]
    %v2241 = vld [vmem:[#allocation4 + $0x14c] sm:$0xf]
    %v2242 = vld [vmem:[#allocation4 + $0x150] sm:$0xf]
    %v2243 = vld [vmem:[#allocation4 + $0x154] sm:$0xf]
    %v2244 = vld [vmem:[#allocation4 + $0x158] sm:$0xf]
    %v2245 = vld [vmem:[#allocation4 + $0x15c] sm:$0xf]
    %v2246 = vld [vmem:[#allocation4 + $0x160] sm:$0xf]
    %v2247 = vld [vmem:[#allocation4 + $0x164] sm:$0xf]
    %v2248 = vld [vmem:[#allocation4 + $0x168] sm:$0xf]
    %v2249 = vld [vmem:[#allocation4 + $0x16c] sm:$0xf]
    %v2250 = vld [vmem:[#allocation4 + $0x170] sm:$0xf]
    %v2251 = vld [vmem:[#allocation4 + $0x174] sm:$0xf]
    %v2252 = vld [vmem:[#allocation4 + $0x178] sm:$0xf]
    %v2253 = vld [vmem:[#allocation4 + $0x17c] sm:$0xf]
    %v2254 = vld [vmem:[#allocation4 + $0x180] sm:$0xf]
    %v2255 = vld [vmem:[#allocation4 + $0x184] sm:$0xf]
    %v2256 = vld [vmem:[#allocation4 + $0x188] sm:$0xf]
    %v2257 = vld [vmem:[#allocation4 + $0x18c] sm:$0xf]
    %v2258 = vld [vmem:[%s6] sm:$0x1]
    %v2260 = vlaneseq
    %v2261 = vshrl.u32 %v2260, 7
    %v2262 = vsub.s32 0, %v2261
    %v2263 = vrot.slane %v2258, %v2262
    %v2365 = vunpack.c.l.b16 %v2158
    %v2366 = vunpack.c.l.b16 %v2159
    %v2367 = vunpack.c.l.b16 %v2160
    %v2368 = vunpack.c.l.b16 %v2161
    %v2369 = vunpack.c.l.b16 %v2162
    %v2370 = vunpack.c.l.b16 %v2163
    %v2371 = vunpack.c.l.b16 %v2164
    %v2372 = vunpack.c.l.b16 %v2165
    %v2373 = vunpack.c.l.b16 %v2166
    %v2374 = vunpack.c.l.b16 %v2167
    %v2375 = vunpack.c.l.b16 %v2168
    %v2376 = vunpack.c.l.b16 %v2169
    %v2377 = vunpack.c.l.b16 %v2170
    %v2378 = vunpack.c.l.b16 %v2171
    %v2379 = vunpack.c.l.b16 %v2172
    %v2380 = vunpack.c.l.b16 %v2173
    %v2381 = vunpack.c.l.b16 %v2174
    %v2382 = vunpack.c.l.b16 %v2175
    %v2383 = vunpack.c.l.b16 %v2176
    %v2384 = vunpack.c.l.b16 %v2177
    %v2385 = vunpack.c.l.b16 %v2178
    %v2386 = vunpack.c.l.b16 %v2179
    %v2387 = vunpack.c.l.b16 %v2180
    %v2388 = vunpack.c.l.b16 %v2181
    %v2389 = vunpack.c.l.b16 %v2182
    %v2390 = vunpack.c.l.b16 %v2183
    %v2391 = vunpack.c.l.b16 %v2184
    %v2392 = vunpack.c.l.b16 %v2185
    %v2393 = vunpack.c.l.b16 %v2186
    %v2394 = vunpack.c.l.b16 %v2187
    %v2395 = vunpack.c.l.b16 %v2188
    %v2396 = vunpack.c.l.b16 %v2189
    %v2397 = vunpack.c.l.b16 %v2190
    %v2398 = vunpack.c.l.b16 %v2191
    %v2399 = vunpack.c.l.b16 %v2192
    %v2400 = vunpack.c.l.b16 %v2193
    %v2401 = vunpack.c.l.b16 %v2194
    %v2402 = vunpack.c.l.b16 %v2195
    %v2403 = vunpack.c.l.b16 %v2196
    %v2404 = vunpack.c.l.b16 %v2197
    %v2405 = vunpack.c.l.b16 %v2198
    %v2406 = vunpack.c.l.b16 %v2199
    %v2407 = vunpack.c.l.b16 %v2200
    %v2408 = vunpack.c.l.b16 %v2201
    %v2409 = vunpack.c.l.b16 %v2202
    %v2410 = vunpack.c.l.b16 %v2203
    %v2411 = vunpack.c.l.b16 %v2204
    %v2412 = vunpack.c.l.b16 %v2205
    %v2413 = vunpack.c.l.b16 %v2206
    %v2414 = vunpack.c.l.b16 %v2207
    %v2415 = vunpack.c.l.b16 %v2208
    %v2416 = vunpack.c.l.b16 %v2209
    %v2417 = vunpack.c.l.b16 %v2210
    %v2418 = vunpack.c.l.b16 %v2211
    %v2419 = vunpack.c.l.b16 %v2212
    %v2420 = vunpack.c.l.b16 %v2213
    %v2421 = vunpack.c.l.b16 %v2214
    %v2422 = vunpack.c.l.b16 %v2215
    %v2423 = vunpack.c.l.b16 %v2216
    %v2424 = vunpack.c.l.b16 %v2217
    %v2425 = vunpack.c.l.b16 %v2218
    %v2426 = vunpack.c.l.b16 %v2219
    %v2427 = vunpack.c.l.b16 %v2220
    %v2428 = vunpack.c.l.b16 %v2221
    %v2429 = vunpack.c.l.b16 %v2222
    %v2430 = vunpack.c.l.b16 %v2223
    %v2431 = vunpack.c.l.b16 %v2224
    %v2432 = vunpack.c.l.b16 %v2225
    %v2433 = vunpack.c.l.b16 %v2226
    %v2434 = vunpack.c.l.b16 %v2227
    %v2435 = vunpack.c.l.b16 %v2228
    %v2436 = vunpack.c.l.b16 %v2229
    %v2437 = vunpack.c.l.b16 %v2230
    %v2438 = vunpack.c.l.b16 %v2231
    %v2439 = vunpack.c.l.b16 %v2232
    %v2440 = vunpack.c.l.b16 %v2233
    %v2441 = vunpack.c.l.b16 %v2234
    %v2442 = vunpack.c.l.b16 %v2235
    %v2443 = vunpack.c.l.b16 %v2236
    %v2444 = vunpack.c.l.b16 %v2237
    %v2445 = vunpack.c.l.b16 %v2238
    %v2446 = vunpack.c.l.b16 %v2239
    %v2447 = vunpack.c.l.b16 %v2240
    %v2448 = vunpack.c.l.b16 %v2241
    %v2449 = vunpack.c.l.b16 %v2242
    %v2450 = vunpack.c.l.b16 %v2243
    %v2451 = vunpack.c.l.b16 %v2244
    %v2452 = vunpack.c.l.b16 %v2245
    %v2453 = vunpack.c.l.b16 %v2246
    %v2454 = vunpack.c.l.b16 %v2247
    %v2455 = vunpack.c.l.b16 %v2248
    %v2456 = vunpack.c.l.b16 %v2249
    %v2457 = vunpack.c.l.b16 %v2250
    %v2458 = vunpack.c.l.b16 %v2251
    %v2459 = vunpack.c.l.b16 %v2252
    %v2460 = vunpack.c.l.b16 %v2253
    %v2461 = vunpack.c.l.b16 %v2254
    %v2462 = vunpack.c.l.b16 %v2255
    %v2463 = vunpack.c.l.b16 %v2256
    %v2464 = vunpack.c.l.b16 %v2257
    %v2465 = vpack.c.b16 %v2366, %v2365
    %v2466 = vpack.c.b16 %v2368, %v2367
    %v2467 = vpack.c.b16 %v2370, %v2369
    %v2468 = vpack.c.b16 %v2372, %v2371
    %v2469 = vpack.c.b16 %v2374, %v2373
    %v2470 = vpack.c.b16 %v2376, %v2375
    %v2471 = vpack.c.b16 %v2378, %v2377
    %v2472 = vpack.c.b16 %v2380, %v2379
    %v2473 = vpack.c.b16 %v2382, %v2381
    %v2474 = vpack.c.b16 %v2384, %v2383
    %v2475 = vpack.c.b16 %v2386, %v2385
    %v2476 = vpack.c.b16 %v2388, %v2387
    %v2477 = vpack.c.b16 %v2390, %v2389
    %v2478 = vpack.c.b16 %v2392, %v2391
    %v2479 = vpack.c.b16 %v2394, %v2393
    %v2480 = vpack.c.b16 %v2396, %v2395
    %v2481 = vpack.c.b16 %v2398, %v2397
    %v2482 = vpack.c.b16 %v2400, %v2399
    %v2483 = vpack.c.b16 %v2402, %v2401
    %v2484 = vpack.c.b16 %v2404, %v2403
    %v2485 = vpack.c.b16 %v2406, %v2405
    %v2486 = vpack.c.b16 %v2408, %v2407
    %v2487 = vpack.c.b16 %v2410, %v2409
    %v2488 = vpack.c.b16 %v2412, %v2411
    %v2489 = vpack.c.b16 %v2414, %v2413
    %v2490 = vpack.c.b16 %v2416, %v2415
    %v2491 = vpack.c.b16 %v2418, %v2417
    %v2492 = vpack.c.b16 %v2420, %v2419
    %v2493 = vpack.c.b16 %v2422, %v2421
    %v2494 = vpack.c.b16 %v2424, %v2423
    %v2495 = vpack.c.b16 %v2426, %v2425
    %v2496 = vpack.c.b16 %v2428, %v2427
    %v2497 = vpack.c.b16 %v2430, %v2429
    %v2498 = vpack.c.b16 %v2432, %v2431
    %v2499 = vpack.c.b16 %v2434, %v2433
    %v2500 = vpack.c.b16 %v2436, %v2435
    %v2501 = vpack.c.b16 %v2438, %v2437
    %v2502 = vpack.c.b16 %v2440, %v2439
    %v2503 = vpack.c.b16 %v2442, %v2441
    %v2504 = vpack.c.b16 %v2444, %v2443
    %v2505 = vpack.c.b16 %v2446, %v2445
    %v2506 = vpack.c.b16 %v2448, %v2447
    %v2507 = vpack.c.b16 %v2450, %v2449
    %v2508 = vpack.c.b16 %v2452, %v2451
    %v2509 = vpack.c.b16 %v2454, %v2453
    %v2510 = vpack.c.b16 %v2456, %v2455
    %v2511 = vpack.c.b16 %v2458, %v2457
    %v2512 = vpack.c.b16 %v2460, %v2459
    %v2513 = vpack.c.b16 %v2462, %v2461
    %v2514 = vpack.c.b16 %v2464, %v2463
    %vm2565 = vcmask 261120
    %v2567 = vsel %vm2565, %v2136, 0
    %v2570 = vsel %vm2565, %v2143, 0
    %v2573 = vsel %vm2565, %v2150, 0
    %v2576 = vsel %vm2565, %v2157, 0
    %2578 = vmatprep.subr.bf16.mxu0 0
    %2579 = vmatpush1.bf16.msra.mxu0 %v2472
    %2580 = vmatprep.subr.bf16.mxu0 0
    %2581 = vmatpush1.bf16.msra.mxu0 %v2471
    %2582 = vmatprep.subr.bf16.mxu0 0
    %2583 = vmatpush1.bf16.msra.mxu0 %v2470
    %2584 = vmatprep.subr.bf16.mxu0 0
    %2585 = vmatpush1.bf16.msra.mxu0 %v2469
    %2586 = vmatprep.subr.bf16.mxu0 0
    %2587 = vmatpush1.bf16.msra.mxu0 %v2468
    %2588 = vmatprep.subr.bf16.mxu0 0
    %2589 = vmatpush1.bf16.msra.mxu0 %v2467
    %2590 = vmatprep.subr.bf16.mxu0 0
    %2591 = vmatpush1.bf16.msra.mxu0 %v2466
    %2592 = vmatprep.subr.bf16.mxu0 0
    %2593 = vmatpush1.bf16.msra.mxu0 %v2465
    %2594 = vmatprep.subr.bf16.mxu0 0
    %2595 = vmatpush2.bf16.msra.mxu0 %v2480
    %2596 = vmatprep.subr.bf16.mxu0 0
    %2597 = vmatpush2.bf16.msra.mxu0 %v2479
    %2598 = vmatprep.subr.bf16.mxu0 0
    %2599 = vmatpush2.bf16.msra.mxu0 %v2478
    %2600 = vmatprep.subr.bf16.mxu0 0
    %2601 = vmatpush2.bf16.msra.mxu0 %v2477
    %2602 = vmatprep.subr.bf16.mxu0 0
    %2603 = vmatpush2.bf16.msra.mxu0 %v2476
    %2604 = vmatprep.subr.bf16.mxu0 0
    %2605 = vmatpush2.bf16.msra.mxu0 %v2475
    %2606 = vmatprep.subr.bf16.mxu0 0
    %2607 = vmatpush2.bf16.msra.mxu0 %v2474
    %2608 = vmatprep.subr.bf16.mxu0 0
    %2609 = vmatpush2.bf16.msra.mxu0 %v2473
    %2610 = vmatprep.mubr.bf16.mxu0 %v2131
    %2611 = vmatmul.mubr.bf16.gmra.mxu0 %v2130
    %v2612 = vpop.f32.mrf.mxu0
    %v2613 = vadd.f32 %v2263, %v2612
    %v2614 = vpop.f32.mrf.mxu0
    %v2615 = vpop.f32.mrf.mxu0
    %v2616 = vadd.f32 %v2263, %v2615
    %v2617 = vpop.f32.mrf.mxu0
    %2618 = vmatprep.mubr.bf16.mxu0 %v2138
    %2619 = vmatmul.mubr.bf16.gmra.mxu0 %v2137
    %v2620 = vpop.f32.mrf.mxu0
    %v2621 = vadd.f32 %v2263, %v2620
    %v2622 = vpop.f32.mrf.mxu0
    %v2623 = vpop.f32.mrf.mxu0
    %v2624 = vadd.f32 %v2263, %v2623
    %v2625 = vpop.f32.mrf.mxu0
    %2626 = vmatprep.mubr.bf16.mxu0 %v2145
    %2627 = vmatmul.mubr.bf16.gmra.mxu0 %v2144
    %v2628 = vpop.f32.mrf.mxu0
    %v2629 = vadd.f32 %v2263, %v2628
    %v2630 = vpop.f32.mrf.mxu0
    %v2631 = vpop.f32.mrf.mxu0
    %v2632 = vadd.f32 %v2263, %v2631
    %v2633 = vpop.f32.mrf.mxu0
    %2634 = vmatprep.mubr.bf16.mxu0 %v2152
    %2635 = vmatmul.mubr.bf16.gmra.mxu0 %v2151
    %v2636 = vpop.f32.mrf.mxu0
    %v2637 = vadd.f32 %v2263, %v2636
    %v2638 = vpop.f32.mrf.mxu0
    %v2639 = vpop.f32.mrf.mxu0
    %v2640 = vadd.f32 %v2263, %v2639
    %v2641 = vpop.f32.mrf.mxu0
    %2642 = vdwg.mxu0
    %2643 = vmatprep.subr.bf16.mxu0 0
    %2644 = vmatpush1.bf16.msra.mxu0 %v2488
    %2645 = vmatprep.subr.bf16.mxu0 0
    %2646 = vmatpush1.bf16.msra.mxu0 %v2487
    %2647 = vmatprep.subr.bf16.mxu0 0
    %2648 = vmatpush1.bf16.msra.mxu0 %v2486
    %2649 = vmatprep.subr.bf16.mxu0 0
    %2650 = vmatpush1.bf16.msra.mxu0 %v2485
    %2651 = vmatprep.subr.bf16.mxu0 0
    %2652 = vmatpush1.bf16.msra.mxu0 %v2484
    %2653 = vmatprep.subr.bf16.mxu0 0
    %2654 = vmatpush1.bf16.msra.mxu0 %v2483
    %2655 = vmatprep.subr.bf16.mxu0 0
    %2656 = vmatpush1.bf16.msra.mxu0 %v2482
    %2657 = vmatprep.subr.bf16.mxu0 0
    %2658 = vmatpush1.bf16.msra.mxu0 %v2481
    %2659 = vmatprep.subr.bf16.mxu0 0
    %2660 = vmatpush2.bf16.msra.mxu0 %v2496
    %2661 = vmatprep.subr.bf16.mxu0 0
    %2662 = vmatpush2.bf16.msra.mxu0 %v2495
    %2663 = vmatprep.subr.bf16.mxu0 0
    %2664 = vmatpush2.bf16.msra.mxu0 %v2494
    %2665 = vmatprep.subr.bf16.mxu0 0
    %2666 = vmatpush2.bf16.msra.mxu0 %v2493
    %2667 = vmatprep.subr.bf16.mxu0 0
    %2668 = vmatpush2.bf16.msra.mxu0 %v2492
    %2669 = vmatprep.subr.bf16.mxu0 0
    %2670 = vmatpush2.bf16.msra.mxu0 %v2491
    %2671 = vmatprep.subr.bf16.mxu0 0
    %2672 = vmatpush2.bf16.msra.mxu0 %v2490
    %2673 = vmatprep.subr.bf16.mxu0 0
    %2674 = vmatpush2.bf16.msra.mxu0 %v2489
    %2675 = vmatprep.mubr.bf16.mxu0 %v2133
    %2676 = vmatmul.mubr.bf16.gmra.mxu0 %v2132
    %v2677 = vpop.f32.mrf.mxu0
    %v2678 = vadd.f32 %v2613, %v2677
    %v2679 = vpop.f32.mrf.mxu0
    %v2680 = vpop.f32.mrf.mxu0
    %v2681 = vadd.f32 %v2616, %v2680
    %v2682 = vpop.f32.mrf.mxu0
    %2683 = vmatprep.mubr.bf16.mxu0 %v2140
    %2684 = vmatmul.mubr.bf16.gmra.mxu0 %v2139
    %v2685 = vpop.f32.mrf.mxu0
    %v2686 = vadd.f32 %v2621, %v2685
    %v2687 = vpop.f32.mrf.mxu0
    %v2688 = vpop.f32.mrf.mxu0
    %v2689 = vadd.f32 %v2624, %v2688
    %v2690 = vpop.f32.mrf.mxu0
    %2691 = vmatprep.mubr.bf16.mxu0 %v2147
    %2692 = vmatmul.mubr.bf16.gmra.mxu0 %v2146
    %v2693 = vpop.f32.mrf.mxu0
    %v2694 = vadd.f32 %v2629, %v2693
    %v2695 = vpop.f32.mrf.mxu0
    %v2696 = vpop.f32.mrf.mxu0
    %v2697 = vadd.f32 %v2632, %v2696
    %v2698 = vpop.f32.mrf.mxu0
    %2699 = vmatprep.mubr.bf16.mxu0 %v2154
    %2700 = vmatmul.mubr.bf16.gmra.mxu0 %v2153
    %v2701 = vpop.f32.mrf.mxu0
    %v2702 = vadd.f32 %v2637, %v2701
    %v2703 = vpop.f32.mrf.mxu0
    %v2704 = vpop.f32.mrf.mxu0
    %v2705 = vadd.f32 %v2640, %v2704
    %v2706 = vpop.f32.mrf.mxu0
    %2707 = vdwg.mxu0
    %2708 = vmatprep.subr.bf16.mxu0 0
    %2709 = vmatpush1.bf16.msra.mxu0 %v2504
    %2710 = vmatprep.subr.bf16.mxu0 0
    %2711 = vmatpush1.bf16.msra.mxu0 %v2503
    %2712 = vmatprep.subr.bf16.mxu0 0
    %2713 = vmatpush1.bf16.msra.mxu0 %v2502
    %2714 = vmatprep.subr.bf16.mxu0 0
    %2715 = vmatpush1.bf16.msra.mxu0 %v2501
    %2716 = vmatprep.subr.bf16.mxu0 0
    %2717 = vmatpush1.bf16.msra.mxu0 %v2500
    %2718 = vmatprep.subr.bf16.mxu0 0
    %2719 = vmatpush1.bf16.msra.mxu0 %v2499
    %2720 = vmatprep.subr.bf16.mxu0 0
    %2721 = vmatpush1.bf16.msra.mxu0 %v2498
    %2722 = vmatprep.subr.bf16.mxu0 0
    %2723 = vmatpush1.bf16.msra.mxu0 %v2497
    %2724 = vmatprep.subr.bf16.mxu0 0
    %2725 = vmatpush2.bf16.msra.mxu0 %v2512
    %2726 = vmatprep.subr.bf16.mxu0 0
    %2727 = vmatpush2.bf16.msra.mxu0 %v2511
    %2728 = vmatprep.subr.bf16.mxu0 0
    %2729 = vmatpush2.bf16.msra.mxu0 %v2510
    %2730 = vmatprep.subr.bf16.mxu0 0
    %2731 = vmatpush2.bf16.msra.mxu0 %v2509
    %2732 = vmatprep.subr.bf16.mxu0 0
    %2733 = vmatpush2.bf16.msra.mxu0 %v2508
    %2734 = vmatprep.subr.bf16.mxu0 0
    %2735 = vmatpush2.bf16.msra.mxu0 %v2507
    %2736 = vmatprep.subr.bf16.mxu0 0
    %2737 = vmatpush2.bf16.msra.mxu0 %v2506
    %2738 = vmatprep.subr.bf16.mxu0 0
    %2739 = vmatpush2.bf16.msra.mxu0 %v2505
    %2740 = vmatprep.mubr.bf16.mxu0 %v2135
    %2741 = vmatmul.mubr.bf16.gmra.mxu0 %v2134
    %v2742 = vpop.f32.mrf.mxu0
    %v2743 = vadd.f32 %v2678, %v2742
    %v2744 = vpop.f32.mrf.mxu0
    %v2745 = vpop.f32.mrf.mxu0
    %v2746 = vadd.f32 %v2681, %v2745
    %v2747 = vpop.f32.mrf.mxu0
    %2748 = vmatprep.mubr.bf16.mxu0 %v2142
    %2749 = vmatmul.mubr.bf16.gmra.mxu0 %v2141
    %v2750 = vpop.f32.mrf.mxu0
    %v2751 = vadd.f32 %v2686, %v2750
    %v2752 = vpop.f32.mrf.mxu0
    %v2753 = vpop.f32.mrf.mxu0
    %v2754 = vadd.f32 %v2689, %v2753
    %v2755 = vpop.f32.mrf.mxu0
    %2756 = vmatprep.mubr.bf16.mxu0 %v2149
    %2757 = vmatmul.mubr.bf16.gmra.mxu0 %v2148
    %v2758 = vpop.f32.mrf.mxu0
    %v2759 = vadd.f32 %v2694, %v2758
    %v2760 = vpop.f32.mrf.mxu0
    %v2761 = vpop.f32.mrf.mxu0
    %v2762 = vadd.f32 %v2697, %v2761
    %v2763 = vpop.f32.mrf.mxu0
    %2764 = vmatprep.mubr.bf16.mxu0 %v2156
    %2765 = vmatmul.mubr.bf16.gmra.mxu0 %v2155
    %v2766 = vpop.f32.mrf.mxu0
    %v2767 = vadd.f32 %v2702, %v2766
    %v2768 = vpop.f32.mrf.mxu0
    %v2769 = vpop.f32.mrf.mxu0
    %v2770 = vadd.f32 %v2705, %v2769
    %v2771 = vpop.f32.mrf.mxu0
    %2772 = vdwg.mxu0
    %2773 = vmatprep.subr.bf16.mxu0 0
    %2774 = vmatpush1.bf16.msra.mxu0 0
    %2775 = vmatprep.subr.bf16.mxu0 0
    %2776 = vmatpush1.bf16.msra.mxu0 0
    %2777 = vmatprep.subr.bf16.mxu0 0
    %2778 = vmatpush1.bf16.msra.mxu0 0
    %2779 = vmatprep.subr.bf16.mxu0 0
    %2780 = vmatpush1.bf16.msra.mxu0 0
    %2781 = vmatprep.subr.bf16.mxu0 0
    %2782 = vmatpush1.bf16.msra.mxu0 0
    %2783 = vmatprep.subr.bf16.mxu0 0
    %2784 = vmatpush1.bf16.msra.mxu0 0
    %2785 = vmatprep.subr.bf16.mxu0 0
    %2786 = vmatpush1.bf16.msra.mxu0 %v2514
    %2787 = vmatprep.subr.bf16.mxu0 0
    %2788 = vmatpush1.bf16.msra.mxu0 %v2513
    %2789 = vmatprep.subr.bf16.mxu0 0
    %2790 = vmatpush2.bf16.msra.mxu0 0
    %2791 = vmatprep.subr.bf16.mxu0 0
    %2792 = vmatpush2.bf16.msra.mxu0 0
    %2793 = vmatprep.subr.bf16.mxu0 0
    %2794 = vmatpush2.bf16.msra.mxu0 0
    %2795 = vmatprep.subr.bf16.mxu0 0
    %2796 = vmatpush2.bf16.msra.mxu0 0
    %2797 = vmatprep.subr.bf16.mxu0 0
    %2798 = vmatpush2.bf16.msra.mxu0 0
    %2799 = vmatprep.subr.bf16.mxu0 0
    %2800 = vmatpush2.bf16.msra.mxu0 0
    %2801 = vmatprep.subr.bf16.mxu0 0
    %2802 = vmatpush2.bf16.msra.mxu0 0
    %2803 = vmatprep.subr.bf16.mxu0 0
    %2804 = vmatpush2.bf16.msra.mxu0 0
    %2805 = vmatprep.mubr.bf16.mxu0 0
    %2806 = vmatmul.mubr.bf16.gmra.mxu0 %v2567
    %v2807 = vpop.f32.mrf.mxu0
    %v2808 = vadd.f32 %v2743, %v2807
    %v2809 = vpop.f32.mrf.mxu0
    %v2810 = vpop.f32.mrf.mxu0
    %v2811 = vadd.f32 %v2746, %v2810
    %v2812 = vpop.f32.mrf.mxu0
    %2813 = vmatprep.mubr.bf16.mxu0 0
    %2814 = vmatmul.mubr.bf16.gmra.mxu0 %v2570
    %v2815 = vpop.f32.mrf.mxu0
    %v2816 = vadd.f32 %v2751, %v2815
    %v2817 = vpop.f32.mrf.mxu0
    %v2818 = vpop.f32.mrf.mxu0
    %v2819 = vadd.f32 %v2754, %v2818
    %v2820 = vpop.f32.mrf.mxu0
    %2821 = vmatprep.mubr.bf16.mxu0 0
    %2822 = vmatmul.mubr.bf16.gmra.mxu0 %v2573
    %v2823 = vpop.f32.mrf.mxu0
    %v2824 = vadd.f32 %v2759, %v2823
    %v2825 = vpop.f32.mrf.mxu0
    %v2826 = vpop.f32.mrf.mxu0
    %v2827 = vadd.f32 %v2762, %v2826
    %v2828 = vpop.f32.mrf.mxu0
    %2829 = vmatprep.mubr.bf16.mxu0 0
    %2830 = vmatmul.mubr.bf16.gmra.mxu0 %v2576
    %v2831 = vpop.f32.mrf.mxu0
    %v2832 = vadd.f32 %v2767, %v2831
    %v2833 = vpop.f32.mrf.mxu0
    %v2834 = vpop.f32.mrf.mxu0
    %v2835 = vadd.f32 %v2770, %v2834
    %v2836 = vpop.f32.mrf.mxu0
    %2837 = vdwg.mxu0
    %2838 = vmax.xlane.f32.xlu0 %v2808
    %v2839 = vpop.xlane.xlu0 %2838
    %2840 = vmax.xlane.f32.xlu0 %v2811
    %v2841 = vpop.xlane.xlu0 %2840
    %2842 = vmax.xlane.f32.xlu0 %v2816
    %v2843 = vpop.xlane.xlu0 %2842
    %2844 = vmax.xlane.f32.xlu0 %v2819
    %v2845 = vpop.xlane.xlu0 %2844
    %2846 = vmax.xlane.f32.xlu0 %v2824
    %v2847 = vpop.xlane.xlu0 %2846
    %2848 = vmax.xlane.f32.xlu0 %v2827
    %v2849 = vpop.xlane.xlu0 %2848
    %2850 = vmax.xlane.f32.xlu0 %v2832
    %v2851 = vpop.xlane.xlu0 %2850
    %2852 = vmax.xlane.f32.xlu0 %v2835
    %v2853 = vpop.xlane.xlu0 %2852
    %v2854 = vsub.f32 %v2808, %v2839
    %v2855 = vsub.f32 %v2811, %v2841
    %v2856 = vsub.f32 %v2816, %v2843
    %v2857 = vsub.f32 %v2819, %v2845
    %v2858 = vsub.f32 %v2824, %v2847
    %v2859 = vsub.f32 %v2827, %v2849
    %v2860 = vsub.f32 %v2832, %v2851
    %v2861 = vsub.f32 %v2835, %v2853
    %v2862 = vmul.f32 %v2854, 1.442695
    %v2863 = vpow.pop %v2862
    %v2864 = vmul.f32 %v2855, 1.442695
    %v2865 = vpow.pop %v2864
    %v2866 = vmul.f32 %v2856, 1.442695
    %v2867 = vpow.pop %v2866
    %v2868 = vmul.f32 %v2857, 1.442695
    %v2869 = vpow.pop %v2868
    %v2870 = vmul.f32 %v2858, 1.442695
    %v2871 = vpow.pop %v2870
    %v2872 = vmul.f32 %v2859, 1.442695
    %v2873 = vpow.pop %v2872
    %v2874 = vmul.f32 %v2860, 1.442695
    %v2875 = vpow.pop %v2874
    %v2876 = vmul.f32 %v2861, 1.442695
    %v2877 = vpow.pop %v2876
    %2878 = vadd.xlane.f32.xlu0 %v2863
    %v2879 = vpop.xlane.xlu0 %2878
    %2880 = vadd.xlane.f32.xlu0 %v2865
    %v2881 = vpop.xlane.xlu0 %2880
    %2882 = vadd.xlane.f32.xlu0 %v2867
    %v2883 = vpop.xlane.xlu0 %2882
    %2884 = vadd.xlane.f32.xlu0 %v2869
    %v2885 = vpop.xlane.xlu0 %2884
    %2886 = vadd.xlane.f32.xlu0 %v2871
    %v2887 = vpop.xlane.xlu0 %2886
    %2888 = vadd.xlane.f32.xlu0 %v2873
    %v2889 = vpop.xlane.xlu0 %2888
    %2890 = vadd.xlane.f32.xlu0 %v2875
    %v2891 = vpop.xlane.xlu0 %2890
    %2892 = vadd.xlane.f32.xlu0 %v2877
    %v2893 = vpop.xlane.xlu0 %2892
    %v2894 = vlog2.pop %v2879
    %v2895 = vmul.f32 %v2894, 0.6931472
    %v2896 = vlog2.pop %v2881
    %v2897 = vmul.f32 %v2896, 0.6931472
    %v2898 = vlog2.pop %v2883
    %v2899 = vmul.f32 %v2898, 0.6931472
    %v2900 = vlog2.pop %v2885
    %v2901 = vmul.f32 %v2900, 0.6931472
    %v2902 = vlog2.pop %v2887
    %v2903 = vmul.f32 %v2902, 0.6931472
    %v2904 = vlog2.pop %v2889
    %v2905 = vmul.f32 %v2904, 0.6931472
    %v2906 = vlog2.pop %v2891
    %v2907 = vmul.f32 %v2906, 0.6931472
    %v2908 = vlog2.pop %v2893
    %v2909 = vmul.f32 %v2908, 0.6931472
    %v2910 = vsub.f32 %v2854, %v2895
    %v2911 = vsub.f32 %v2855, %v2897
    %v2912 = vsub.f32 %v2856, %v2899
    %v2913 = vsub.f32 %v2857, %v2901
    %v2914 = vsub.f32 %v2858, %v2903
    %v2915 = vsub.f32 %v2859, %v2905
    %v2916 = vsub.f32 %v2860, %v2907
    %v2917 = vsub.f32 %v2861, %v2909
    %2918 = vst [vmem:[%s7] sm:$0xff] %v2910
    %2919 = vst [vmem:[%s7 + $0x8] sm:$0xff] %v2911
    %2920 = vst [vmem:[%s7 + $0x10] sm:$0xff] %v2912
    %2921 = vst [vmem:[%s7 + $0x18] sm:$0xff] %v2913
    %2922 = vst [vmem:[%s7 + $0x20] sm:$0xff] %v2914
    %2923 = vst [vmem:[%s7 + $0x28] sm:$0xff] %v2915
    %2924 = vst [vmem:[%s7 + $0x30] sm:$0xff] %v2916
    %2925 = vst [vmem:[%s7 + $0x38] sm:$0xff] %v2917
    // Predicated region
    $region38: #{model_forward.1} parent=1 // pred_check
      _
    $region39: #{model_forward.1} parent=1 // pred_check_branch
      %2927 = sbr.rel (0) target = $region41
    $region40: #{model_forward.1} parent=1 // pred_region
      _
    $region41: #{model_forward.1} parent=1 // pred_fallthru
      _
    // Predicated region
    $region42: #{model_forward.1} parent=1 // pred_check
      _
    $region43: #{model_forward.1} parent=1 // pred_check_branch
      %2929 = sbr.rel (0) target = $region45
    $region44: #{model_forward.1} parent=1 // pred_region
      _
    $region45: #{model_forward.1} parent=1 // pred_fallthru
      _
    %2930 = vsyncpa [#allocation3], 1
    %2931 = vsyncpa [#allocation5], 1

</llo_original>
